<compile_context>
chip_gen: v5e
topology: v5e:2x2
jax: 0.10.0
libtpu: 0.0.40
codegen_flags: <defaults>
</compile_context>

<pallas_src>
import functools

import jax
import jax.numpy as jnp
from jax.experimental import pallas as pl
from jax.experimental.pallas import tpu as pltpu

# ---- small config consistent with the module (hidden -> Linear(hidden, label_num)) ----
B, S = 2, 8          # batch, sequence length
H = 32               # hidden size ("768" in real BERT)
NH = 4               # attention heads
D = H // NH          # head dim
I = 64               # FFN intermediate size
NLAYERS = 2
VOCAB = 50
MAXPOS = 16
LABEL_NUM = 4
LN_EPS = 1e-12


# ------------------------- fused encoder kernel -------------------------

def _layernorm(x, gamma, beta):
    mu = jnp.mean(x, axis=-1, keepdims=True)
    xc = x - mu
    var = jnp.mean(xc * xc, axis=-1, keepdims=True)
    return xc * jax.lax.rsqrt(var + LN_EPS) * gamma + beta


def _encoder_kernel(emb_ref, mask_ref, eg_ref, eb_ref,
                    wqkv_ref, bqkv_ref, wo_ref, bo_ref, g1_ref, b1_ref,
                    wi_ref, bi_ref, wo2_ref, bo2_ref, g2_ref, b2_ref,
                    out_ref, x_scr, *, batch, seq, nheads, hdim):
    """One grid step == one encoder layer. x lives in VMEM scratch across layers."""
    l = pl.program_id(0)
    hidden = nheads * hdim

    @pl.when(l == 0)
    def _():
        # BERT embedding LayerNorm (embedding dropout is identity in eval mode).
        x_scr[...] = _layernorm(emb_ref[...], eg_ref[...], eb_ref[...])

    x = x_scr[...]                                       # (batch*seq, H) f32, layer input

    # ---- fused Q|K|V projection: one (M,H)x(H,3H) matmul, bf16 operands, f32 acc ----
    qkv = jnp.dot(x.astype(jnp.bfloat16), wqkv_ref[...],
                  preferred_element_type=jnp.float32) + bqkv_ref[...]      # (M, 3H)

    mask_b = mask_ref[...][:, None, :]                   # (batch, 1, seq), hoisted out of head loop
    scale = 1.0 / float(hdim) ** 0.5

    # ---- attention: all (batch, head) pairs in this single grid step ----
    ctx_heads = []
    for h in range(nheads):                              # static unroll (NH=4)
        qh = qkv[:, h * hdim:(h + 1) * hdim]
        kh = qkv[:, hidden + h * hdim: hidden + (h + 1) * hdim]
        vh = qkv[:, 2 * hidden + h * hdim: 2 * hidden + (h + 1) * hdim]
        qh = qh.reshape(batch, seq, hdim).astype(jnp.bfloat16)
        kh = kh.reshape(batch, seq, hdim).astype(jnp.bfloat16)
        vh = vh.reshape(batch, seq, hdim).astype(jnp.bfloat16)
        s = jnp.einsum("bqd,bkd->bqk", qh, kh,
                       preferred_element_type=jnp.float32) * scale        # (batch, S, S)
        s = s + mask_b                                   # additive -10000 mask
        s = s - jnp.max(s, axis=-1, keepdims=True)
        p = jnp.exp(s)
        p = p * pl.reciprocal(jnp.sum(p, axis=-1, keepdims=True), approx=True)
        # TODO(synk): attention-probs dropout (p=0.1) is identity in eval mode.
        ch = jnp.einsum("bqk,bkd->bqd", p.astype(jnp.bfloat16), vh,
                        preferred_element_type=jnp.float32)               # (batch, S, D)
        ctx_heads.append(ch.reshape(batch * seq, hdim))
    ctx = jnp.concatenate(ctx_heads, axis=-1)            # (M, H), head-major lane layout

    # ---- attention output projection + add & norm ----
    attn_out = jnp.dot(ctx.astype(jnp.bfloat16), wo_ref[...],
                       preferred_element_type=jnp.float32) + bo_ref[...]
    x = _layernorm(attn_out + x, g1_ref[...], b1_ref[...])

    # ---- FFN + add & norm ----
    inter = jnp.dot(x.astype(jnp.bfloat16), wi_ref[...],
                    preferred_element_type=jnp.float32) + bi_ref[...]
    # TODO(synk): HF BERT uses exact erf-GELU; tanh approximation used here.
    c = 0.7978845608028654  # sqrt(2/pi)
    inter = 0.5 * inter * (1.0 + jnp.tanh(c * (inter + 0.044715 * inter * inter * inter)))
    ffn = jnp.dot(inter.astype(jnp.bfloat16), wo2_ref[...],
                  preferred_element_type=jnp.float32) + bo2_ref[...]
    x = _layernorm(ffn + x, g2_ref[...], b2_ref[...])

    x_scr[...] = x                                       # carry to next layer (VMEM resident)

    @pl.when(l == pl.num_programs(0) - 1)
    def _():
        out_ref[...] = x                                 # single HBM writeback at the end


def run_encoder(emb, mask_bias, params):
    """emb: (B*S, H) f32; mask_bias: (B, S) f32 additive mask. Returns (B*S, H) f32."""
    Bn, Sn = mask_bias.shape
    M = Bn * Sn
    L = params["wqkv"].shape[0]

    def full2(shape):
        return pl.BlockSpec(shape, lambda l: (0, 0))

    def per_layer(shape):  # leading layer axis squeezed out of the kernel ref
        return pl.BlockSpec((None,) + shape, lambda l: (l, 0, 0))

    kern = functools.partial(_encoder_kernel, batch=Bn, seq=Sn, nheads=NH, hdim=D)

    return pl.pallas_call(
        kern,
        grid=(L,),
        in_specs=[
            full2((M, H)),                                # embeddings
            full2((Bn, Sn)),                              # additive mask bias
            full2((1, H)), full2((1, H)),                 # embedding LN gamma/beta
            per_layer((H, 3 * H)), per_layer((1, 3 * H)),  # fused QKV weight/bias
            per_layer((H, H)), per_layer((1, H)),          # attn out proj
            per_layer((1, H)), per_layer((1, H)),          # LN1 gamma/beta
            per_layer((H, I)), per_layer((1, I)),          # FFN in
            per_layer((I, H)), per_layer((1, H)),          # FFN out
            per_layer((1, H)), per_layer((1, H)),          # LN2 gamma/beta
        ],
        out_specs=pl.BlockSpec((M, H), lambda l: (0, 0)),
        out_shape=jax.ShapeDtypeStruct((M, H), jnp.float32),
        scratch_shapes=[pltpu.VMEM((M, H), jnp.float32)],  # layer-resident activation
        compiler_params=pltpu.CompilerParams(
            dimension_semantics=("arbitrary",)),           # layers are sequential
    )(
        emb, mask_bias,
        params["emb_ln_g"].reshape(1, H), params["emb_ln_b"].reshape(1, H),
        params["wqkv"].astype(jnp.bfloat16), params["bqkv"].reshape(L, 1, 3 * H),
        params["wo"].astype(jnp.bfloat16), params["bo"].reshape(L, 1, H),
        params["ln1_g"].reshape(L, 1, H), params["ln1_b"].reshape(L, 1, H),
        params["wi"].astype(jnp.bfloat16), params["bi"].reshape(L, 1, I),
        params["wo2"].astype(jnp.bfloat16), params["bo2"].reshape(L, 1, H),
        params["ln2_g"].reshape(L, 1, H), params["ln2_b"].reshape(L, 1, H),
    )


# ------------------------- parameters -------------------------

def init_params(key):
    keys = iter(jax.random.split(key, 64))

    def nrm(shape, scale=0.02):
        return (scale * jax.random.normal(next(keys), shape)).astype(jnp.float32)

    return {
        "word_emb": nrm((VOCAB, H)),
        "pos_emb": nrm((MAXPOS, H)),
        "type_emb": nrm((2, H)),
        "emb_ln_g": jnp.ones((H,), jnp.float32),
        "emb_ln_b": jnp.zeros((H,), jnp.float32),
        # per-layer weights stacked along a leading layer axis; Q|K|V fused into (H, 3H).
        "wqkv": nrm((NLAYERS, H, 3 * H)),
        "bqkv": jnp.zeros((NLAYERS, 3 * H), jnp.float32),
        "wo": nrm((NLAYERS, H, H)),
        "bo": jnp.zeros((NLAYERS, H), jnp.float32),
        "ln1_g": jnp.ones((NLAYERS, H), jnp.float32),
        "ln1_b": jnp.zeros((NLAYERS, H), jnp.float32),
        "wi": nrm((NLAYERS, H, I)),
        "bi": jnp.zeros((NLAYERS, I), jnp.float32),
        "wo2": nrm((NLAYERS, I, H)),
        "bo2": jnp.zeros((NLAYERS, H), jnp.float32),
        "ln2_g": jnp.ones((NLAYERS, H), jnp.float32),
        "ln2_b": jnp.zeros((NLAYERS, H), jnp.float32),
        # self.fc = nn.Linear(768, label_num) -> here Linear(H, LABEL_NUM)
        "fc_w": nrm((H, LABEL_NUM)),
        "fc_b": jnp.zeros((LABEL_NUM,), jnp.float32),
    }


# ------------------------- forward (mirrors BERT_Classifier.forward) -------------------------

def bert_classifier_forward(params, input_ids, mask, label=None):
    Bn, Sn = input_ids.shape

    # BERT embeddings: gathers in plain JAX (tiny); embedding LN is fused in the kernel.
    emb = (params["word_emb"][input_ids]
           + params["pos_emb"][:Sn][None, :, :]
           + params["type_emb"][0][None, None, :])
    emb = emb.reshape(Bn * Sn, H).astype(jnp.float32)

    # extended attention mask kept at [B, S]; head/query broadcast happens in-kernel.
    mask_bias = (1.0 - mask.astype(jnp.float32)) * -10000.0

    hidden = run_encoder(emb, mask_bias, params).reshape(Bn, Sn, H)  # encoder(...)[0]

    cls = hidden[:, 0, :]               # x = x[:, 0, :]
    # TODO(synk): nn.Dropout(0.1) is identity in eval mode; stochastic dropout not implemented.
    # 4-wide classifier head + cross-entropy in plain JAX (too small for a Pallas launch).
    logits = cls @ params["fc_w"] + params["fc_b"]

    if label is None:
        return None, logits
    logp = jax.nn.log_softmax(logits, axis=-1)
    loss = -jnp.mean(jnp.take_along_axis(logp, label[:, None], axis=-1)[:, 0])
    return loss, logits


# ------------------------- demo -------------------------

if __name__ == "__main__":
    key = jax.random.PRNGKey(0)
    pkey, ikey, lkey = jax.random.split(key, 3)
    params = init_params(pkey)

    input_ids = jax.random.randint(ikey, (B, S), 0, VOCAB, dtype=jnp.int32)
    mask = jnp.ones((B, S), dtype=jnp.int32).at[:, 6:].set(0)   # last 2 positions padded
    labels = jax.random.randint(lkey, (B,), 0, LABEL_NUM, dtype=jnp.int32)

    fwd = jax.jit(bert_classifier_forward)

    # label == None branch -> (None, logits)
    none_loss, logits_only = fwd(params, input_ids, mask, None)
    # label given -> (loss, logits)
    loss, logits = fwd(params, input_ids, mask, labels)

    jax.block_until_ready((logits_only, loss, logits))
    assert none_loss is None
    assert logits.shape == (B, LABEL_NUM)
    assert logits_only.shape == (B, LABEL_NUM)
    assert loss.shape == ()
    assert bool(jnp.isfinite(loss))
    print("KERNEL_OK")
</pallas_src>

<mosaic_0001>
module attributes {stable_mosaic.version = 11 : i64} {
  func.func @_encoder_kernel(%arg0: i32, %arg1: memref<16x32xf32, #tpu.memory_space<vmem>>, %arg2: memref<2x8xf32, #tpu.memory_space<vmem>>, %arg3: memref<1x32xf32, #tpu.memory_space<vmem>>, %arg4: memref<1x32xf32, #tpu.memory_space<vmem>>, %arg5: memref<1x32x96xbf16, #tpu.memory_space<vmem>>, %arg6: memref<1x1x96xf32, #tpu.memory_space<vmem>>, %arg7: memref<1x32x32xbf16, #tpu.memory_space<vmem>>, %arg8: memref<1x1x32xf32, #tpu.memory_space<vmem>>, %arg9: memref<1x1x32xf32, #tpu.memory_space<vmem>>, %arg10: memref<1x1x32xf32, #tpu.memory_space<vmem>>, %arg11: memref<1x32x64xbf16, #tpu.memory_space<vmem>>, %arg12: memref<1x1x64xf32, #tpu.memory_space<vmem>>, %arg13: memref<1x64x32xbf16, #tpu.memory_space<vmem>>, %arg14: memref<1x1x32xf32, #tpu.memory_space<vmem>>, %arg15: memref<1x1x32xf32, #tpu.memory_space<vmem>>, %arg16: memref<1x1x32xf32, #tpu.memory_space<vmem>>, %arg17: memref<16x32xf32, #tpu.memory_space<vmem>>, %arg18: memref<16x32xf32, #tpu.memory_space<vmem>>) attributes {dimension_semantics = [#tpu.dimension_semantics<arbitrary>], iteration_bounds = array<i64: 2>, scalar_prefetch = 0 : i64, scratch_operands = 1 : i64, tpu.core_type = #tpu.core_type<tc>, window_params = [{pipeline_mode = #tpu.pipeline_mode<synchronous>, transform_indices = @transform_0, window_bounds = array<i64: 16, 32>}, {pipeline_mode = #tpu.pipeline_mode<synchronous>, transform_indices = @transform_1, window_bounds = array<i64: 2, 8>}, {pipeline_mode = #tpu.pipeline_mode<synchronous>, transform_indices = @transform_2, window_bounds = array<i64: 1, 32>}, {pipeline_mode = #tpu.pipeline_mode<synchronous>, transform_indices = @transform_3, window_bounds = array<i64: 1, 32>}, {transform_indices = @transform_4, window_bounds = array<i64: 1, 32, 96>}, {transform_indices = @transform_5, window_bounds = array<i64: 1, 1, 96>}, {transform_indices = @transform_6, window_bounds = array<i64: 1, 32, 32>}, {transform_indices = @transform_7, window_bounds = array<i64: 1, 1, 32>}, {transform_indices = @transform_8, window_bounds = array<i64: 1, 1, 32>}, {transform_indices = @transform_9, window_bounds = array<i64: 1, 1, 32>}, {transform_indices = @transform_10, window_bounds = array<i64: 1, 32, 64>}, {transform_indices = @transform_11, window_bounds = array<i64: 1, 1, 64>}, {transform_indices = @transform_12, window_bounds = array<i64: 1, 64, 32>}, {transform_indices = @transform_13, window_bounds = array<i64: 1, 1, 32>}, {transform_indices = @transform_14, window_bounds = array<i64: 1, 1, 32>}, {transform_indices = @transform_15, window_bounds = array<i64: 1, 1, 32>}, {pipeline_mode = #tpu.pipeline_mode<synchronous>, transform_indices = @transform_16, window_bounds = array<i64: 16, 32>}]} {
    %c0_i32 = arith.constant 0 : i32
    %0 = arith.cmpi eq, %arg0, %c0_i32 : i32
    %1 = arith.extui %0 : i1 to i32
    %c0_i32_0 = arith.constant 0 : i32
    %2 = arith.cmpi ne, %1, %c0_i32_0 : i32
    scf.if %2 {
      %c0_80 = arith.constant 0 : index
      %c0_81 = arith.constant 0 : index
      %214 = vector.load %arg1[%c0_80, %c0_81] : memref<16x32xf32, #tpu.memory_space<vmem>>, vector<16x32xf32>
      %c0_82 = arith.constant 0 : index
      %c0_83 = arith.constant 0 : index
      %215 = vector.load %arg3[%c0_82, %c0_83] : memref<1x32xf32, #tpu.memory_space<vmem>>, vector<1x32xf32>
      %c0_84 = arith.constant 0 : index
      %c0_85 = arith.constant 0 : index
      %216 = vector.load %arg4[%c0_84, %c0_85] : memref<1x32xf32, #tpu.memory_space<vmem>>, vector<1x32xf32>
      %cst_86 = arith.constant dense<0.000000e+00> : vector<16xf32>
      %217 = vector.multi_reduction <add>, %214, %cst_86 [1] : vector<16x32xf32> to vector<16xf32>
      %218 = vector.shape_cast %217 : vector<16xf32> to vector<16x1xf32>
      %cst_87 = arith.constant 3.200000e+01 : f32
      %219 = vector.broadcast %cst_87 : f32 to vector<16x1xf32>
      %220 = arith.divf %218, %219 : vector<16x1xf32>
      %221 = vector.broadcast %220 : vector<16x1xf32> to vector<16x32xf32>
      %222 = arith.subf %214, %221 : vector<16x32xf32>
      %223 = arith.mulf %222, %222 : vector<16x32xf32>
      %cst_88 = arith.constant dense<0.000000e+00> : vector<16xf32>
      %224 = vector.multi_reduction <add>, %223, %cst_88 [1] : vector<16x32xf32> to vector<16xf32>
      %225 = vector.shape_cast %224 : vector<16xf32> to vector<16x1xf32>
      %cst_89 = arith.constant 3.200000e+01 : f32
      %226 = vector.broadcast %cst_89 : f32 to vector<16x1xf32>
      %227 = arith.divf %225, %226 : vector<16x1xf32>
      %cst_90 = arith.constant 9.99999996E-13 : f32
      %228 = vector.broadcast %cst_90 : f32 to vector<16x1xf32>
      %229 = arith.addf %227, %228 : vector<16x1xf32>
      %230 = math.rsqrt %229 : vector<16x1xf32>
      %231 = vector.broadcast %230 : vector<16x1xf32> to vector<16x32xf32>
      %232 = arith.mulf %222, %231 : vector<16x32xf32>
      %233 = vector.broadcast %215 : vector<1x32xf32> to vector<16x32xf32>
      %234 = arith.mulf %232, %233 : vector<16x32xf32>
      %235 = vector.broadcast %216 : vector<1x32xf32> to vector<16x32xf32>
      %236 = arith.addf %234, %235 : vector<16x32xf32>
      %c0_91 = arith.constant 0 : index
      %c0_92 = arith.constant 0 : index
      %237 = vector.load %arg18[%c0_91, %c0_92] : memref<16x32xf32, #tpu.memory_space<vmem>>, vector<16x32xf32>
      tpu.vector_store %arg18[%c0_91, %c0_92], %236 {strides = array<i32>} : memref<16x32xf32, #tpu.memory_space<vmem>>, vector<16x32xf32>,
    } else {
    }
    %c0 = arith.constant 0 : index
    %c0_1 = arith.constant 0 : index
    %3 = vector.load %arg18[%c0, %c0_1] : memref<16x32xf32, #tpu.memory_space<vmem>>, vector<16x32xf32>
    %4 = arith.truncf %3 : vector<16x32xf32> to vector<16x32xbf16>
    %c0_2 = arith.constant 0 : index
    %c0_3 = arith.constant 0 : index
    %c0_4 = arith.constant 0 : index
    %5 = vector.load %arg5[%c0_2, %c0_3, %c0_4] : memref<1x32x96xbf16, #tpu.memory_space<vmem>>, vector<1x32x96xbf16>
    %6 = vector.shape_cast %5 : vector<1x32x96xbf16> to vector<32x96xbf16>
    %cst = arith.constant dense<0.000000e+00> : vector<16x96xf32>
    %7 = tpu.matmul %4, %6, %cst {dimension_numbers = #tpu.dot_dimension_numbers<[1], [0], [0], [1], [0, 0, 1, 1], [], []>} : vector<16x32xbf16>, vector<32x96xbf16>, vector<16x96xf32> -> vector<16x96xf32>
    %c0_5 = arith.constant 0 : index
    %c0_6 = arith.constant 0 : index
    %c0_7 = arith.constant 0 : index
    %8 = vector.load %arg6[%c0_5, %c0_6, %c0_7] : memref<1x1x96xf32, #tpu.memory_space<vmem>>, vector<1x1x96xf32>
    %9 = vector.shape_cast %8 : vector<1x1x96xf32> to vector<1x96xf32>
    %10 = vector.broadcast %9 : vector<1x96xf32> to vector<16x96xf32>
    %11 = arith.addf %7, %10 : vector<16x96xf32>
    %c0_8 = arith.constant 0 : index
    %c0_9 = arith.constant 0 : index
    %12 = vector.load %arg2[%c0_8, %c0_9] : memref<2x8xf32, #tpu.memory_space<vmem>>, vector<2x8xf32>
    %13 = vector.shape_cast %12 : vector<2x8xf32> to vector<2x1x8xf32>
    %14 = vector.extract_strided_slice %11 {offsets = [0, 0], sizes = [16, 8], strides = [1, 1]} : vector<16x96xf32> to vector<16x8xf32>
    %15 = vector.extract_strided_slice %11 {offsets = [0, 32], sizes = [16, 8], strides = [1, 1]} : vector<16x96xf32> to vector<16x8xf32>
    %16 = vector.extract_strided_slice %11 {offsets = [0, 64], sizes = [16, 8], strides = [1, 1]} : vector<16x96xf32> to vector<16x8xf32>
    %17 = vector.shape_cast %14 : vector<16x8xf32> to vector<2x8x8xf32>
    %18 = arith.truncf %17 : vector<2x8x8xf32> to vector<2x8x8xbf16>
    %19 = vector.shape_cast %15 : vector<16x8xf32> to vector<2x8x8xf32>
    %20 = arith.truncf %19 : vector<2x8x8xf32> to vector<2x8x8xbf16>
    %21 = vector.shape_cast %16 : vector<16x8xf32> to vector<2x8x8xf32>
    %22 = arith.truncf %21 : vector<2x8x8xf32> to vector<2x8x8xbf16>
    "tpu.trace_start"() <{level = 10 : i32, message = "bqd,bkd->bqk"}> : () -> ()
    %cst_10 = arith.constant dense<0.000000e+00> : vector<2x8x8xf32>
    %23 = tpu.matmul %18, %20, %cst_10 {dimension_numbers = #tpu.dot_dimension_numbers<[2], [2], [1], [1], [0, 0, 0, 1, 1, 1], [0], [0]>} : vector<2x8x8xbf16>, vector<2x8x8xbf16>, vector<2x8x8xf32> -> vector<2x8x8xf32>
    "tpu.trace_stop"() : () -> ()
    %cst_11 = arith.constant 0.353553385 : f32
    %24 = vector.broadcast %cst_11 : f32 to vector<2x8x8xf32>
    %25 = arith.mulf %23, %24 : vector<2x8x8xf32>
    %26 = vector.broadcast %13 : vector<2x1x8xf32> to vector<2x8x8xf32>
    %27 = arith.addf %25, %26 : vector<2x8x8xf32>
    %cst_12 = arith.constant dense<0xFF800000> : vector<2x8xf32>
    %28 = vector.multi_reduction <maximumf>, %27, %cst_12 [2] : vector<2x8x8xf32> to vector<2x8xf32>
    %29 = vector.shape_cast %28 : vector<2x8xf32> to vector<2x8x1xf32>
    %30 = vector.broadcast %29 : vector<2x8x1xf32> to vector<2x8x8xf32>
    %31 = arith.subf %27, %30 : vector<2x8x8xf32>
    %32 = math.exp %31 : vector<2x8x8xf32>
    %cst_13 = arith.constant dense<0.000000e+00> : vector<2x8xf32>
    %33 = vector.multi_reduction <add>, %32, %cst_13 [2] : vector<2x8x8xf32> to vector<2x8xf32>
    %34 = vector.shape_cast %33 : vector<2x8xf32> to vector<2x8x1xf32>
    %35 = tpu.reciprocal %34 {approx = true} : vector<2x8x1xf32> -> vector<2x8x1xf32>
    %36 = vector.broadcast %35 : vector<2x8x1xf32> to vector<2x8x8xf32>
    %37 = arith.mulf %32, %36 : vector<2x8x8xf32>
    %38 = arith.truncf %37 : vector<2x8x8xf32> to vector<2x8x8xbf16>
    "tpu.trace_start"() <{level = 10 : i32, message = "bqk,bkd->bqd"}> : () -> ()
    %cst_14 = arith.constant dense<0.000000e+00> : vector<2x8x8xf32>
    %39 = tpu.matmul %38, %22, %cst_14 {dimension_numbers = #tpu.dot_dimension_numbers<[2], [1], [1], [2], [0, 0, 0, 1, 1, 2], [0], [0]>} : vector<2x8x8xbf16>, vector<2x8x8xbf16>, vector<2x8x8xf32> -> vector<2x8x8xf32>
    "tpu.trace_stop"() : () -> ()
    %40 = vector.shape_cast %39 : vector<2x8x8xf32> to vector<16x8xf32>
    %41 = vector.extract_strided_slice %11 {offsets = [0, 8], sizes = [16, 8], strides = [1, 1]} : vector<16x96xf32> to vector<16x8xf32>
    %42 = vector.extract_strided_slice %11 {offsets = [0, 40], sizes = [16, 8], strides = [1, 1]} : vector<16x96xf32> to vector<16x8xf32>
    %43 = vector.extract_strided_slice %11 {offsets = [0, 72], sizes = [16, 8], strides = [1, 1]} : vector<16x96xf32> to vector<16x8xf32>
    %44 = vector.shape_cast %41 : vector<16x8xf32> to vector<2x8x8xf32>
    %45 = arith.truncf %44 : vector<2x8x8xf32> to vector<2x8x8xbf16>
    %46 = vector.shape_cast %42 : vector<16x8xf32> to vector<2x8x8xf32>
    %47 = arith.truncf %46 : vector<2x8x8xf32> to vector<2x8x8xbf16>
    %48 = vector.shape_cast %43 : vector<16x8xf32> to vector<2x8x8xf32>
    %49 = arith.truncf %48 : vector<2x8x8xf32> to vector<2x8x8xbf16>
    "tpu.trace_start"() <{level = 10 : i32, message = "bqd,bkd->bqk"}> : () -> ()
    %cst_15 = arith.constant dense<0.000000e+00> : vector<2x8x8xf32>
    %50 = tpu.matmul %45, %47, %cst_15 {dimension_numbers = #tpu.dot_dimension_numbers<[2], [2], [1], [1], [0, 0, 0, 1, 1, 1], [0], [0]>} : vector<2x8x8xbf16>, vector<2x8x8xbf16>, vector<2x8x8xf32> -> vector<2x8x8xf32>
    "tpu.trace_stop"() : () -> ()
    %cst_16 = arith.constant 0.353553385 : f32
    %51 = vector.broadcast %cst_16 : f32 to vector<2x8x8xf32>
    %52 = arith.mulf %50, %51 : vector<2x8x8xf32>
    %53 = vector.broadcast %13 : vector<2x1x8xf32> to vector<2x8x8xf32>
    %54 = arith.addf %52, %53 : vector<2x8x8xf32>
    %cst_17 = arith.constant dense<0xFF800000> : vector<2x8xf32>
    %55 = vector.multi_reduction <maximumf>, %54, %cst_17 [2] : vector<2x8x8xf32> to vector<2x8xf32>
    %56 = vector.shape_cast %55 : vector<2x8xf32> to vector<2x8x1xf32>
    %57 = vector.broadcast %56 : vector<2x8x1xf32> to vector<2x8x8xf32>
    %58 = arith.subf %54, %57 : vector<2x8x8xf32>
    %59 = math.exp %58 : vector<2x8x8xf32>
    %cst_18 = arith.constant dense<0.000000e+00> : vector<2x8xf32>
    %60 = vector.multi_reduction <add>, %59, %cst_18 [2] : vector<2x8x8xf32> to vector<2x8xf32>
    %61 = vector.shape_cast %60 : vector<2x8xf32> to vector<2x8x1xf32>
    %62 = tpu.reciprocal %61 {approx = true} : vector<2x8x1xf32> -> vector<2x8x1xf32>
    %63 = vector.broadcast %62 : vector<2x8x1xf32> to vector<2x8x8xf32>
    %64 = arith.mulf %59, %63 : vector<2x8x8xf32>
    %65 = arith.truncf %64 : vector<2x8x8xf32> to vector<2x8x8xbf16>
    "tpu.trace_start"() <{level = 10 : i32, message = "bqk,bkd->bqd"}> : () -> ()
    %cst_19 = arith.constant dense<0.000000e+00> : vector<2x8x8xf32>
    %66 = tpu.matmul %65, %49, %cst_19 {dimension_numbers = #tpu.dot_dimension_numbers<[2], [1], [1], [2], [0, 0, 0, 1, 1, 2], [0], [0]>} : vector<2x8x8xbf16>, vector<2x8x8xbf16>, vector<2x8x8xf32> -> vector<2x8x8xf32>
    "tpu.trace_stop"() : () -> ()
    %67 = vector.shape_cast %66 : vector<2x8x8xf32> to vector<16x8xf32>
    %68 = vector.extract_strided_slice %11 {offsets = [0, 16], sizes = [16, 8], strides = [1, 1]} : vector<16x96xf32> to vector<16x8xf32>
    %69 = vector.extract_strided_slice %11 {offsets = [0, 48], sizes = [16, 8], strides = [1, 1]} : vector<16x96xf32> to vector<16x8xf32>
    %70 = vector.extract_strided_slice %11 {offsets = [0, 80], sizes = [16, 8], strides = [1, 1]} : vector<16x96xf32> to vector<16x8xf32>
    %71 = vector.shape_cast %68 : vector<16x8xf32> to vector<2x8x8xf32>
    %72 = arith.truncf %71 : vector<2x8x8xf32> to vector<2x8x8xbf16>
    %73 = vector.shape_cast %69 : vector<16x8xf32> to vector<2x8x8xf32>
    %74 = arith.truncf %73 : vector<2x8x8xf32> to vector<2x8x8xbf16>
    %75 = vector.shape_cast %70 : vector<16x8xf32> to vector<2x8x8xf32>
    %76 = arith.truncf %75 : vector<2x8x8xf32> to vector<2x8x8xbf16>
    "tpu.trace_start"() <{level = 10 : i32, message = "bqd,bkd->bqk"}> : () -> ()
    %cst_20 = arith.constant dense<0.000000e+00> : vector<2x8x8xf32>
    %77 = tpu.matmul %72, %74, %cst_20 {dimension_numbers = #tpu.dot_dimension_numbers<[2], [2], [1], [1], [0, 0, 0, 1, 1, 1], [0], [0]>} : vector<2x8x8xbf16>, vector<2x8x8xbf16>, vector<2x8x8xf32> -> vector<2x8x8xf32>
    "tpu.trace_stop"() : () -> ()
    %cst_21 = arith.constant 0.353553385 : f32
    %78 = vector.broadcast %cst_21 : f32 to vector<2x8x8xf32>
    %79 = arith.mulf %77, %78 : vector<2x8x8xf32>
    %80 = vector.broadcast %13 : vector<2x1x8xf32> to vector<2x8x8xf32>
    %81 = arith.addf %79, %80 : vector<2x8x8xf32>
    %cst_22 = arith.constant dense<0xFF800000> : vector<2x8xf32>
    %82 = vector.multi_reduction <maximumf>, %81, %cst_22 [2] : vector<2x8x8xf32> to vector<2x8xf32>
    %83 = vector.shape_cast %82 : vector<2x8xf32> to vector<2x8x1xf32>
    %84 = vector.broadcast %83 : vector<2x8x1xf32> to vector<2x8x8xf32>
    %85 = arith.subf %81, %84 : vector<2x8x8xf32>
    %86 = math.exp %85 : vector<2x8x8xf32>
    %cst_23 = arith.constant dense<0.000000e+00> : vector<2x8xf32>
    %87 = vector.multi_reduction <add>, %86, %cst_23 [2] : vector<2x8x8xf32> to vector<2x8xf32>
    %88 = vector.shape_cast %87 : vector<2x8xf32> to vector<2x8x1xf32>
    %89 = tpu.reciprocal %88 {approx = true} : vector<2x8x1xf32> -> vector<2x8x1xf32>
    %90 = vector.broadcast %89 : vector<2x8x1xf32> to vector<2x8x8xf32>
    %91 = arith.mulf %86, %90 : vector<2x8x8xf32>
    %92 = arith.truncf %91 : vector<2x8x8xf32> to vector<2x8x8xbf16>
    "tpu.trace_start"() <{level = 10 : i32, message = "bqk,bkd->bqd"}> : () -> ()
    %cst_24 = arith.constant dense<0.000000e+00> : vector<2x8x8xf32>
    %93 = tpu.matmul %92, %76, %cst_24 {dimension_numbers = #tpu.dot_dimension_numbers<[2], [1], [1], [2], [0, 0, 0, 1, 1, 2], [0], [0]>} : vector<2x8x8xbf16>, vector<2x8x8xbf16>, vector<2x8x8xf32> -> vector<2x8x8xf32>
    "tpu.trace_stop"() : () -> ()
    %94 = vector.shape_cast %93 : vector<2x8x8xf32> to vector<16x8xf32>
    %95 = vector.extract_strided_slice %11 {offsets = [0, 24], sizes = [16, 8], strides = [1, 1]} : vector<16x96xf32> to vector<16x8xf32>
    %96 = vector.extract_strided_slice %11 {offsets = [0, 56], sizes = [16, 8], strides = [1, 1]} : vector<16x96xf32> to vector<16x8xf32>
    %97 = vector.extract_strided_slice %11 {offsets = [0, 88], sizes = [16, 8], strides = [1, 1]} : vector<16x96xf32> to vector<16x8xf32>
    %98 = vector.shape_cast %95 : vector<16x8xf32> to vector<2x8x8xf32>
    %99 = arith.truncf %98 : vector<2x8x8xf32> to vector<2x8x8xbf16>
    %100 = vector.shape_cast %96 : vector<16x8xf32> to vector<2x8x8xf32>
    %101 = arith.truncf %100 : vector<2x8x8xf32> to vector<2x8x8xbf16>
    %102 = vector.shape_cast %97 : vector<16x8xf32> to vector<2x8x8xf32>
    %103 = arith.truncf %102 : vector<2x8x8xf32> to vector<2x8x8xbf16>
    "tpu.trace_start"() <{level = 10 : i32, message = "bqd,bkd->bqk"}> : () -> ()
    %cst_25 = arith.constant dense<0.000000e+00> : vector<2x8x8xf32>
    %104 = tpu.matmul %99, %101, %cst_25 {dimension_numbers = #tpu.dot_dimension_numbers<[2], [2], [1], [1], [0, 0, 0, 1, 1, 1], [0], [0]>} : vector<2x8x8xbf16>, vector<2x8x8xbf16>, vector<2x8x8xf32> -> vector<2x8x8xf32>
    "tpu.trace_stop"() : () -> ()
    %cst_26 = arith.constant 0.353553385 : f32
    %105 = vector.broadcast %cst_26 : f32 to vector<2x8x8xf32>
    %106 = arith.mulf %104, %105 : vector<2x8x8xf32>
    %107 = vector.broadcast %13 : vector<2x1x8xf32> to vector<2x8x8xf32>
    %108 = arith.addf %106, %107 : vector<2x8x8xf32>
    %cst_27 = arith.constant dense<0xFF800000> : vector<2x8xf32>
    %109 = vector.multi_reduction <maximumf>, %108, %cst_27 [2] : vector<2x8x8xf32> to vector<2x8xf32>
    %110 = vector.shape_cast %109 : vector<2x8xf32> to vector<2x8x1xf32>
    %111 = vector.broadcast %110 : vector<2x8x1xf32> to vector<2x8x8xf32>
    %112 = arith.subf %108, %111 : vector<2x8x8xf32>
    %113 = math.exp %112 : vector<2x8x8xf32>
    %cst_28 = arith.constant dense<0.000000e+00> : vector<2x8xf32>
    %114 = vector.multi_reduction <add>, %113, %cst_28 [2] : vector<2x8x8xf32> to vector<2x8xf32>
    %115 = vector.shape_cast %114 : vector<2x8xf32> to vector<2x8x1xf32>
    %116 = tpu.reciprocal %115 {approx = true} : vector<2x8x1xf32> -> vector<2x8x1xf32>
    %117 = vector.broadcast %116 : vector<2x8x1xf32> to vector<2x8x8xf32>
    %118 = arith.mulf %113, %117 : vector<2x8x8xf32>
    %119 = arith.truncf %118 : vector<2x8x8xf32> to vector<2x8x8xbf16>
    "tpu.trace_start"() <{level = 10 : i32, message = "bqk,bkd->bqd"}> : () -> ()
    %cst_29 = arith.constant dense<0.000000e+00> : vector<2x8x8xf32>
    %120 = tpu.matmul %119, %103, %cst_29 {dimension_numbers = #tpu.dot_dimension_numbers<[2], [1], [1], [2], [0, 0, 0, 1, 1, 2], [0], [0]>} : vector<2x8x8xbf16>, vector<2x8x8xbf16>, vector<2x8x8xf32> -> vector<2x8x8xf32>
    "tpu.trace_stop"() : () -> ()
    %121 = vector.shape_cast %120 : vector<2x8x8xf32> to vector<16x8xf32>
    %122 = tpu.concatenate %40, %67, %94, %121 in 1 : vector<16x8xf32>, vector<16x8xf32>, vector<16x8xf32>, vector<16x8xf32> -> vector<16x32xf32>
    %123 = arith.truncf %122 : vector<16x32xf32> to vector<16x32xbf16>
    %c0_30 = arith.constant 0 : index
    %c0_31 = arith.constant 0 : index
    %c0_32 = arith.constant 0 : index
    %124 = vector.load %arg7[%c0_30, %c0_31, %c0_32] : memref<1x32x32xbf16, #tpu.memory_space<vmem>>, vector<1x32x32xbf16>
    %125 = vector.shape_cast %124 : vector<1x32x32xbf16> to vector<32x32xbf16>
    %cst_33 = arith.constant dense<0.000000e+00> : vector<16x32xf32>
    %126 = tpu.matmul %123, %125, %cst_33 {dimension_numbers = #tpu.dot_dimension_numbers<[1], [0], [0], [1], [0, 0, 1, 1], [], []>} : vector<16x32xbf16>, vector<32x32xbf16>, vector<16x32xf32> -> vector<16x32xf32>
    %c0_34 = arith.constant 0 : index
    %c0_35 = arith.constant 0 : index
    %c0_36 = arith.constant 0 : index
    %127 = vector.load %arg8[%c0_34, %c0_35, %c0_36] : memref<1x1x32xf32, #tpu.memory_space<vmem>>, vector<1x1x32xf32>
    %128 = vector.shape_cast %127 : vector<1x1x32xf32> to vector<1x32xf32>
    %129 = vector.broadcast %128 : vector<1x32xf32> to vector<16x32xf32>
    %130 = arith.addf %126, %129 : vector<16x32xf32>
    %131 = arith.addf %130, %3 : vector<16x32xf32>
    %c0_37 = arith.constant 0 : index
    %c0_38 = arith.constant 0 : index
    %c0_39 = arith.constant 0 : index
    %132 = vector.load %arg9[%c0_37, %c0_38, %c0_39] : memref<1x1x32xf32, #tpu.memory_space<vmem>>, vector<1x1x32xf32>
    %133 = vector.shape_cast %132 : vector<1x1x32xf32> to vector<1x32xf32>
    %c0_40 = arith.constant 0 : index
    %c0_41 = arith.constant 0 : index
    %c0_42 = arith.constant 0 : index
    %134 = vector.load %arg10[%c0_40, %c0_41, %c0_42] : memref<1x1x32xf32, #tpu.memory_space<vmem>>, vector<1x1x32xf32>
    %135 = vector.shape_cast %134 : vector<1x1x32xf32> to vector<1x32xf32>
    %cst_43 = arith.constant dense<0.000000e+00> : vector<16xf32>
    %136 = vector.multi_reduction <add>, %131, %cst_43 [1] : vector<16x32xf32> to vector<16xf32>
    %137 = vector.shape_cast %136 : vector<16xf32> to vector<16x1xf32>
    %cst_44 = arith.constant 3.200000e+01 : f32
    %138 = vector.broadcast %cst_44 : f32 to vector<16x1xf32>
    %139 = arith.divf %137, %138 : vector<16x1xf32>
    %140 = vector.broadcast %139 : vector<16x1xf32> to vector<16x32xf32>
    %141 = arith.subf %131, %140 : vector<16x32xf32>
    %142 = arith.mulf %141, %141 : vector<16x32xf32>
    %cst_45 = arith.constant dense<0.000000e+00> : vector<16xf32>
    %143 = vector.multi_reduction <add>, %142, %cst_45 [1] : vector<16x32xf32> to vector<16xf32>
    %144 = vector.shape_cast %143 : vector<16xf32> to vector<16x1xf32>
    %cst_46 = arith.constant 3.200000e+01 : f32
    %145 = vector.broadcast %cst_46 : f32 to vector<16x1xf32>
    %146 = arith.divf %144, %145 : vector<16x1xf32>
    %cst_47 = arith.constant 9.99999996E-13 : f32
    %147 = vector.broadcast %cst_47 : f32 to vector<16x1xf32>
    %148 = arith.addf %146, %147 : vector<16x1xf32>
    %149 = math.rsqrt %148 : vector<16x1xf32>
    %150 = vector.broadcast %149 : vector<16x1xf32> to vector<16x32xf32>
    %151 = arith.mulf %141, %150 : vector<16x32xf32>
    %152 = vector.broadcast %133 : vector<1x32xf32> to vector<16x32xf32>
    %153 = arith.mulf %151, %152 : vector<16x32xf32>
    %154 = vector.broadcast %135 : vector<1x32xf32> to vector<16x32xf32>
    %155 = arith.addf %153, %154 : vector<16x32xf32>
    %156 = arith.truncf %155 : vector<16x32xf32> to vector<16x32xbf16>
    %c0_48 = arith.constant 0 : index
    %c0_49 = arith.constant 0 : index
    %c0_50 = arith.constant 0 : index
    %157 = vector.load %arg11[%c0_48, %c0_49, %c0_50] : memref<1x32x64xbf16, #tpu.memory_space<vmem>>, vector<1x32x64xbf16>
    %158 = vector.shape_cast %157 : vector<1x32x64xbf16> to vector<32x64xbf16>
    %cst_51 = arith.constant dense<0.000000e+00> : vector<16x64xf32>
    %159 = tpu.matmul %156, %158, %cst_51 {dimension_numbers = #tpu.dot_dimension_numbers<[1], [0], [0], [1], [0, 0, 1, 1], [], []>} : vector<16x32xbf16>, vector<32x64xbf16>, vector<16x64xf32> -> vector<16x64xf32>
    %c0_52 = arith.constant 0 : index
    %c0_53 = arith.constant 0 : index
    %c0_54 = arith.constant 0 : index
    %160 = vector.load %arg12[%c0_52, %c0_53, %c0_54] : memref<1x1x64xf32, #tpu.memory_space<vmem>>, vector<1x1x64xf32>
    %161 = vector.shape_cast %160 : vector<1x1x64xf32> to vector<1x64xf32>
    %162 = vector.broadcast %161 : vector<1x64xf32> to vector<16x64xf32>
    %163 = arith.addf %159, %162 : vector<16x64xf32>
    %cst_55 = arith.constant 5.000000e-01 : f32
    %164 = vector.broadcast %cst_55 : f32 to vector<16x64xf32>
    %165 = arith.mulf %164, %163 : vector<16x64xf32>
    %cst_56 = arith.constant 4.471500e-02 : f32
    %166 = vector.broadcast %cst_56 : f32 to vector<16x64xf32>
    %167 = arith.mulf %166, %163 : vector<16x64xf32>
    %168 = arith.mulf %167, %163 : vector<16x64xf32>
    %169 = arith.mulf %168, %163 : vector<16x64xf32>
    %170 = arith.addf %163, %169 : vector<16x64xf32>
    %cst_57 = arith.constant 0.797884583 : f32
    %171 = vector.broadcast %cst_57 : f32 to vector<16x64xf32>
    %172 = arith.mulf %171, %170 : vector<16x64xf32>
    %173 = math.tanh %172 : vector<16x64xf32>
    %cst_58 = arith.constant 1.000000e+00 : f32
    %174 = vector.broadcast %cst_58 : f32 to vector<16x64xf32>
    %175 = arith.addf %174, %173 : vector<16x64xf32>
    %176 = arith.mulf %165, %175 : vector<16x64xf32>
    %177 = arith.truncf %176 : vector<16x64xf32> to vector<16x64xbf16>
    %c0_59 = arith.constant 0 : index
    %c0_60 = arith.constant 0 : index
    %c0_61 = arith.constant 0 : index
    %178 = vector.load %arg13[%c0_59, %c0_60, %c0_61] : memref<1x64x32xbf16, #tpu.memory_space<vmem>>, vector<1x64x32xbf16>
    %179 = vector.shape_cast %178 : vector<1x64x32xbf16> to vector<64x32xbf16>
    %cst_62 = arith.constant dense<0.000000e+00> : vector<16x32xf32>
    %180 = tpu.matmul %177, %179, %cst_62 {dimension_numbers = #tpu.dot_dimension_numbers<[1], [0], [0], [1], [0, 0, 1, 1], [], []>} : vector<16x64xbf16>, vector<64x32xbf16>, vector<16x32xf32> -> vector<16x32xf32>
    %c0_63 = arith.constant 0 : index
    %c0_64 = arith.constant 0 : index
    %c0_65 = arith.constant 0 : index
    %181 = vector.load %arg14[%c0_63, %c0_64, %c0_65] : memref<1x1x32xf32, #tpu.memory_space<vmem>>, vector<1x1x32xf32>
    %182 = vector.shape_cast %181 : vector<1x1x32xf32> to vector<1x32xf32>
    %183 = vector.broadcast %182 : vector<1x32xf32> to vector<16x32xf32>
    %184 = arith.addf %180, %183 : vector<16x32xf32>
    %185 = arith.addf %184, %155 : vector<16x32xf32>
    %c0_66 = arith.constant 0 : index
    %c0_67 = arith.constant 0 : index
    %c0_68 = arith.constant 0 : index
    %186 = vector.load %arg15[%c0_66, %c0_67, %c0_68] : memref<1x1x32xf32, #tpu.memory_space<vmem>>, vector<1x1x32xf32>
    %187 = vector.shape_cast %186 : vector<1x1x32xf32> to vector<1x32xf32>
    %c0_69 = arith.constant 0 : index
    %c0_70 = arith.constant 0 : index
    %c0_71 = arith.constant 0 : index
    %188 = vector.load %arg16[%c0_69, %c0_70, %c0_71] : memref<1x1x32xf32, #tpu.memory_space<vmem>>, vector<1x1x32xf32>
    %189 = vector.shape_cast %188 : vector<1x1x32xf32> to vector<1x32xf32>
    %cst_72 = arith.constant dense<0.000000e+00> : vector<16xf32>
    %190 = vector.multi_reduction <add>, %185, %cst_72 [1] : vector<16x32xf32> to vector<16xf32>
    %191 = vector.shape_cast %190 : vector<16xf32> to vector<16x1xf32>
    %cst_73 = arith.constant 3.200000e+01 : f32
    %192 = vector.broadcast %cst_73 : f32 to vector<16x1xf32>
    %193 = arith.divf %191, %192 : vector<16x1xf32>
    %194 = vector.broadcast %193 : vector<16x1xf32> to vector<16x32xf32>
    %195 = arith.subf %185, %194 : vector<16x32xf32>
    %196 = arith.mulf %195, %195 : vector<16x32xf32>
    %cst_74 = arith.constant dense<0.000000e+00> : vector<16xf32>
    %197 = vector.multi_reduction <add>, %196, %cst_74 [1] : vector<16x32xf32> to vector<16xf32>
    %198 = vector.shape_cast %197 : vector<16xf32> to vector<16x1xf32>
    %cst_75 = arith.constant 3.200000e+01 : f32
    %199 = vector.broadcast %cst_75 : f32 to vector<16x1xf32>
    %200 = arith.divf %198, %199 : vector<16x1xf32>
    %cst_76 = arith.constant 9.99999996E-13 : f32
    %201 = vector.broadcast %cst_76 : f32 to vector<16x1xf32>
    %202 = arith.addf %200, %201 : vector<16x1xf32>
    %203 = math.rsqrt %202 : vector<16x1xf32>
    %204 = vector.broadcast %203 : vector<16x1xf32> to vector<16x32xf32>
    %205 = arith.mulf %195, %204 : vector<16x32xf32>
    %206 = vector.broadcast %187 : vector<1x32xf32> to vector<16x32xf32>
    %207 = arith.mulf %205, %206 : vector<16x32xf32>
    %208 = vector.broadcast %189 : vector<1x32xf32> to vector<16x32xf32>
    %209 = arith.addf %207, %208 : vector<16x32xf32>
    %c0_77 = arith.constant 0 : index
    %c0_78 = arith.constant 0 : index
    %210 = vector.load %arg18[%c0_77, %c0_78] : memref<16x32xf32, #tpu.memory_space<vmem>>, vector<16x32xf32>
    tpu.vector_store %arg18[%c0_77, %c0_78], %209 {strides = array<i32>} : memref<16x32xf32, #tpu.memory_space<vmem>>, vector<16x32xf32>,
    %c1_i32 = arith.constant 1 : i32
    %211 = arith.cmpi eq, %arg0, %c1_i32 : i32
    %212 = arith.extui %211 : i1 to i32
    %c0_i32_79 = arith.constant 0 : i32
    %213 = arith.cmpi ne, %212, %c0_i32_79 : i32
    scf.if %213 {
      %c0_80 = arith.constant 0 : index
      %c0_81 = arith.constant 0 : index
      %214 = vector.load %arg17[%c0_80, %c0_81] : memref<16x32xf32, #tpu.memory_space<vmem>>, vector<16x32xf32>
      tpu.vector_store %arg17[%c0_80, %c0_81], %209 {strides = array<i32>} : memref<16x32xf32, #tpu.memory_space<vmem>>, vector<16x32xf32>,
    } else {
    }
    return
  }
  func.func @transform_0(%arg0: i32) -> (i32, i32) {
    %c0_i32 = arith.constant 0 : i32
    %c0_i32_0 = arith.constant 0 : i32
    %c0_i32_1 = arith.constant 0 : i32
    return %c0_i32, %c0_i32_0 : i32, i32
  }
  func.func @transform_1(%arg0: i32) -> (i32, i32) {
    %c0_i32 = arith.constant 0 : i32
    %c0_i32_0 = arith.constant 0 : i32
    %c0_i32_1 = arith.constant 0 : i32
    return %c0_i32, %c0_i32_0 : i32, i32
  }
  func.func @transform_2(%arg0: i32) -> (i32, i32) {
    %c0_i32 = arith.constant 0 : i32
    %c0_i32_0 = arith.constant 0 : i32
    %c0_i32_1 = arith.constant 0 : i32
    return %c0_i32, %c0_i32_0 : i32, i32
  }
  func.func @transform_3(%arg0: i32) -> (i32, i32) {
    %c0_i32 = arith.constant 0 : i32
    %c0_i32_0 = arith.constant 0 : i32
    %c0_i32_1 = arith.constant 0 : i32
    return %c0_i32, %c0_i32_0 : i32, i32
  }
  func.func @transform_4(%arg0: i32) -> (i32, i32, i32) {
    %c0_i32 = arith.constant 0 : i32
    %c0_i32_0 = arith.constant 0 : i32
    %c0_i32_1 = arith.constant 0 : i32
    return %arg0, %c0_i32, %c0_i32_0 : i32, i32, i32
  }
  func.func @transform_5(%arg0: i32) -> (i32, i32, i32) {
    %c0_i32 = arith.constant 0 : i32
    %c0_i32_0 = arith.constant 0 : i32
    %c0_i32_1 = arith.constant 0 : i32
    return %arg0, %c0_i32, %c0_i32_0 : i32, i32, i32
  }
  func.func @transform_6(%arg0: i32) -> (i32, i32, i32) {
    %c0_i32 = arith.constant 0 : i32
    %c0_i32_0 = arith.constant 0 : i32
    %c0_i32_1 = arith.constant 0 : i32
    return %arg0, %c0_i32, %c0_i32_0 : i32, i32, i32
  }
  func.func @transform_7(%arg0: i32) -> (i32, i32, i32) {
    %c0_i32 = arith.constant 0 : i32
    %c0_i32_0 = arith.constant 0 : i32
    %c0_i32_1 = arith.constant 0 : i32
    return %arg0, %c0_i32, %c0_i32_0 : i32, i32, i32
  }
  func.func @transform_8(%arg0: i32) -> (i32, i32, i32) {
    %c0_i32 = arith.constant 0 : i32
    %c0_i32_0 = arith.constant 0 : i32
    %c0_i32_1 = arith.constant 0 : i32
    return %arg0, %c0_i32, %c0_i32_0 : i32, i32, i32
  }
  func.func @transform_9(%arg0: i32) -> (i32, i32, i32) {
    %c0_i32 = arith.constant 0 : i32
    %c0_i32_0 = arith.constant 0 : i32
    %c0_i32_1 = arith.constant 0 : i32
    return %arg0, %c0_i32, %c0_i32_0 : i32, i32, i32
  }
  func.func @transform_10(%arg0: i32) -> (i32, i32, i32) {
    %c0_i32 = arith.constant 0 : i32
    %c0_i32_0 = arith.constant 0 : i32
    %c0_i32_1 = arith.constant 0 : i32
    return %arg0, %c0_i32, %c0_i32_0 : i32, i32, i32
  }
  func.func @transform_11(%arg0: i32) -> (i32, i32, i32) {
    %c0_i32 = arith.constant 0 : i32
    %c0_i32_0 = arith.constant 0 : i32
    %c0_i32_1 = arith.constant 0 : i32
    return %arg0, %c0_i32, %c0_i32_0 : i32, i32, i32
  }
  func.func @transform_12(%arg0: i32) -> (i32, i32, i32) {
    %c0_i32 = arith.constant 0 : i32
    %c0_i32_0 = arith.constant 0 : i32
    %c0_i32_1 = arith.constant 0 : i32
    return %arg0, %c0_i32, %c0_i32_0 : i32, i32, i32
  }
  func.func @transform_13(%arg0: i32) -> (i32, i32, i32) {
    %c0_i32 = arith.constant 0 : i32
    %c0_i32_0 = arith.constant 0 : i32
    %c0_i32_1 = arith.constant 0 : i32
    return %arg0, %c0_i32, %c0_i32_0 : i32, i32, i32
  }
  func.func @transform_14(%arg0: i32) -> (i32, i32, i32) {
    %c0_i32 = arith.constant 0 : i32
    %c0_i32_0 = arith.constant 0 : i32
    %c0_i32_1 = arith.constant 0 : i32
    return %arg0, %c0_i32, %c0_i32_0 : i32, i32, i32
  }
  func.func @transform_15(%arg0: i32) -> (i32, i32, i32) {
    %c0_i32 = arith.constant 0 : i32
    %c0_i32_0 = arith.constant 0 : i32
    %c0_i32_1 = arith.constant 0 : i32
    return %arg0, %c0_i32, %c0_i32_0 : i32, i32, i32
  }
  func.func @transform_16(%arg0: i32) -> (i32, i32) {
    %c0_i32 = arith.constant 0 : i32
    %c0_i32_0 = arith.constant 0 : i32
    %c0_i32_1 = arith.constant 0 : i32
    return %c0_i32, %c0_i32_0 : i32, i32
  }
}

</mosaic_0001>

<llo_original>
// kernel: bert_classifier_forward.1
$region0: #{bert_classifier_forward.1}
  #allocation0 [shape = 'u32[]', space=smem, size = 0x4, offset = 0x4, fixed_abs, tag = 'smem constant byte address 0x4 - core index']
  #allocation1 [shape = 'u32[72,128]{1,0:T(1,128)}', space=vmem, size = 0x9000, scoped, tag = 'internal scratch']
  #allocation2 [shape = 'f32[16,32]{1,0:T(8,128)}', space=vmem, size = 0x2000, scoped, tag = 'scratch operand']
  %s0 = inlined_call_operand.vmem [shape: f32[16,32], index: 0, kind: input, shape index: {}]
  %s1 = inlined_call_operand.vmem [shape: f32[2,8], index: 1, kind: input, shape index: {}]
  %s2 = inlined_call_operand.vmem [shape: f32[1,32], index: 2, kind: input, shape index: {}]
  %s3 = inlined_call_operand.vmem [shape: f32[1,32], index: 3, kind: input, shape index: {}]
  %s4 = inlined_call_operand.vmem [shape: bf16[2,32,96], index: 4, kind: input, shape index: {}]
  %s5 = inlined_call_operand.vmem [shape: f32[2,1,96], index: 5, kind: input, shape index: {}]
  %s6 = inlined_call_operand.vmem [shape: bf16[2,32,32], index: 6, kind: input, shape index: {}]
  %s7 = inlined_call_operand.vmem [shape: f32[2,1,32], index: 7, kind: input, shape index: {}]
  %s8 = inlined_call_operand.vmem [shape: f32[2,1,32], index: 8, kind: input, shape index: {}]
  %s9 = inlined_call_operand.vmem [shape: f32[2,1,32], index: 9, kind: input, shape index: {}]
  %s10 = inlined_call_operand.vmem [shape: bf16[2,32,64], index: 10, kind: input, shape index: {}]
  %s11 = inlined_call_operand.vmem [shape: f32[2,1,64], index: 11, kind: input, shape index: {}]
  %s12 = inlined_call_operand.vmem [shape: bf16[2,64,32], index: 12, kind: input, shape index: {}]
  %s13 = inlined_call_operand.vmem [shape: f32[2,1,32], index: 13, kind: input, shape index: {}]
  %s14 = inlined_call_operand.vmem [shape: f32[2,1,32], index: 14, kind: input, shape index: {}]
  %s15 = inlined_call_operand.vmem [shape: f32[2,1,32], index: 15, kind: input, shape index: {}]
  %s16 = inlined_call_operand.vmem [shape: f32[16,32], index: 16, kind: output, shape index: {}]
  %s17 = sld [smem:[#allocation0]]
  $region105: #{bert_classifier_forward.1} parent=0
    _
  %s19 = ssub.s32 1, %s17
  %s20 = scalar_select 0, %s19, %s17
  loop: start=0, step=1, limit=4
  $region2: #{bert_classifier_forward.1} parent=0 // loop_pre_header
    _
  $region3: #{bert_classifier_forward.1} parent=0 // loop_header
    %s22 = sphi 0, %s26
    %p23 = scmp.ge.s32.totalorder %s22, 4
    %s30 = sphi 0, %s30
    %s32 = sphi 0, %s30
    %s33 = sphi 0, %s32
    %s47 = sphi 0, %s33
    %s51 = sphi 0, %s51
    %s53 = sphi 0, %s51
    %s54 = sphi 0, %s53
    %s68 = sphi 0, %s54
    %s72 = sphi 0, %s72
    %s74 = sphi 0, %s72
    %s75 = sphi 0, %s74
    %s89 = sphi 0, %s75
    %s93 = sphi 0, %s93
    %s95 = sphi 0, %s93
    %s96 = sphi 0, %s95
    %s110 = sphi 0, %s96
    %s116 = sphi 0, %s118
    %s119 = sphi 0, %s116
    %s120 = sphi 0, %s119
    %s136 = sphi 0, %s120
    %s142 = sphi 0, %s144
    %s145 = sphi 0, %s142
    %s146 = sphi 0, %s145
    %s162 = sphi 0, %s146
    %s168 = sphi 0, %s170
    %s171 = sphi 0, %s168
    %s172 = sphi 0, %s171
    %s188 = sphi 0, %s172
    %s194 = sphi 0, %s196
    %s197 = sphi 0, %s194
    %s198 = sphi 0, %s197
    %s214 = sphi 0, %s198
    %s220 = sphi 0, %s222
    %s223 = sphi 0, %s220
    %s224 = sphi 0, %s223
    %s240 = sphi 0, %s224
    %s246 = sphi 0, %s248
    %s249 = sphi 0, %s246
    %s250 = sphi 0, %s249
    %s266 = sphi 0, %s250
    %s272 = sphi 0, %s274
    %s275 = sphi 0, %s272
    %s276 = sphi 0, %s275
    %s292 = sphi 0, %s276
    %s298 = sphi 0, %s300
    %s301 = sphi 0, %s298
    %s302 = sphi 0, %s301
    %s318 = sphi 0, %s302
    %s324 = sphi 0, %s326
    %s327 = sphi 0, %s324
    %s328 = sphi 0, %s327
    %s344 = sphi 0, %s328
    %s350 = sphi 0, %s352
    %s353 = sphi 0, %s350
    %s354 = sphi 0, %s353
    %s370 = sphi 0, %s354
    %s376 = sphi 0, %s378
    %s379 = sphi 0, %s376
    %s380 = sphi 0, %s379
    %s396 = sphi 0, %s380
    %s402 = sphi 0, %s404
    %s405 = sphi 0, %s402
    %s406 = sphi 0, %s405
    %s422 = sphi 0, %s406
    %s426 = sphi 0, %s426
    %s428 = sphi 0, %s426
    %s429 = sphi 0, %s428
    %s443 = sphi 0, %s429
  $region4: #{bert_classifier_forward.1} parent=0 // loop_header_branch
    %25 = sbr.rel (%p23) target = $region8
  $region5: #{bert_classifier_forward.1} parent=0 // loop_body
    %s27 = ssub.s32 %s22, 1
    %s28 = ssub.s32 %s22, 2
    %s29 = sadd.s32 %s22, 1
    %s31 = sadd.s32 %s30, 1
    %p34 = scmp.eq.s32.totalorder %s22, 1
    %p35 = scmp.ne.s32.totalorder %s30, %s32
    %p36 = scmp.eq.s32.totalorder %s22, 0
    %p37 = por %p35, %p36
    %p38 = scmp.ne.s32.totalorder %s30, %s32
    %p39 = scmp.eq.s32.totalorder %s27, 1
    %p40 = por %p38, %p39
    %p41 = scmp.ne.s32.totalorder %s32, %s33
    %p42 = scmp.eq.s32.totalorder %s27, 0
    %p43 = por %p41, %p42
    %p44 = scmp.ne.s32.totalorder %s32, %s33
    %p45 = scmp.eq.s32.totalorder %s28, 1
    %p46 = por %p44, %p45
    %p48 = scmp.ne.s32.totalorder %s33, %s47
    %p49 = scmp.eq.s32.totalorder %s28, 0
    %p50 = por %p48, %p49
    %s52 = sadd.s32 %s51, 1
    %p55 = scmp.eq.s32.totalorder %s22, 1
    %p56 = scmp.ne.s32.totalorder %s51, %s53
    %p57 = scmp.eq.s32.totalorder %s22, 0
    %p58 = por %p56, %p57
    %p59 = scmp.ne.s32.totalorder %s51, %s53
    %p60 = scmp.eq.s32.totalorder %s27, 1
    %p61 = por %p59, %p60
    %p62 = scmp.ne.s32.totalorder %s53, %s54
    %p63 = scmp.eq.s32.totalorder %s27, 0
    %p64 = por %p62, %p63
    %p65 = scmp.ne.s32.totalorder %s53, %s54
    %p66 = scmp.eq.s32.totalorder %s28, 1
    %p67 = por %p65, %p66
    %p69 = scmp.ne.s32.totalorder %s54, %s68
    %p70 = scmp.eq.s32.totalorder %s28, 0
    %p71 = por %p69, %p70
    %s73 = sadd.s32 %s72, 1
    %p76 = scmp.eq.s32.totalorder %s22, 1
    %p77 = scmp.ne.s32.totalorder %s72, %s74
    %p78 = scmp.eq.s32.totalorder %s22, 0
    %p79 = por %p77, %p78
    %p80 = scmp.ne.s32.totalorder %s72, %s74
    %p81 = scmp.eq.s32.totalorder %s27, 1
    %p82 = por %p80, %p81
    %p83 = scmp.ne.s32.totalorder %s74, %s75
    %p84 = scmp.eq.s32.totalorder %s27, 0
    %p85 = por %p83, %p84
    %p86 = scmp.ne.s32.totalorder %s74, %s75
    %p87 = scmp.eq.s32.totalorder %s28, 1
    %p88 = por %p86, %p87
    %p90 = scmp.ne.s32.totalorder %s75, %s89
    %p91 = scmp.eq.s32.totalorder %s28, 0
    %p92 = por %p90, %p91
    %s94 = sadd.s32 %s93, 1
    %p97 = scmp.eq.s32.totalorder %s22, 1
    %p98 = scmp.ne.s32.totalorder %s93, %s95
    %p99 = scmp.eq.s32.totalorder %s22, 0
    %p100 = por %p98, %p99
    %p101 = scmp.ne.s32.totalorder %s93, %s95
    %p102 = scmp.eq.s32.totalorder %s27, 1
    %p103 = por %p101, %p102
    %p104 = scmp.ne.s32.totalorder %s95, %s96
    %p105 = scmp.eq.s32.totalorder %s27, 0
    %p106 = por %p104, %p105
    %p107 = scmp.ne.s32.totalorder %s95, %s96
    %p108 = scmp.eq.s32.totalorder %s28, 1
    %p109 = por %p107, %p108
    %p111 = scmp.ne.s32.totalorder %s96, %s110
    %p112 = scmp.eq.s32.totalorder %s28, 0
    %p113 = por %p111, %p112
    %s114 = ssub.s32 %s22, %s29
    %p115 = scmp.eq.s32.totalorder %s114, 0
    %s117 = sadd.s32 %s116, 1
    %s118 = scalar_select %p115, %s116, %s117
    %p121 = pneg %p115
    %p122 = scmp.eq.s32.totalorder %s22, 1
    %p123 = por %p121, %p122
    %p124 = scmp.ne.s32.totalorder %s116, %s119
    %p125 = scmp.eq.s32.totalorder %s22, 0
    %p126 = por %p124, %p125
    %p127 = scmp.ne.s32.totalorder %s116, %s119
    %p128 = scmp.eq.s32.totalorder %s27, 1
    %p129 = por %p127, %p128
    %p130 = scmp.ne.s32.totalorder %s119, %s120
    %p131 = scmp.eq.s32.totalorder %s27, 0
    %p132 = por %p130, %p131
    %p133 = scmp.ne.s32.totalorder %s119, %s120
    %p134 = scmp.eq.s32.totalorder %s28, 1
    %p135 = por %p133, %p134
    %p137 = scmp.ne.s32.totalorder %s120, %s136
    %p138 = scmp.eq.s32.totalorder %s28, 0
    %p139 = por %p137, %p138
    %s140 = ssub.s32 %s22, %s29
    %p141 = scmp.eq.s32.totalorder %s140, 0
    %s143 = sadd.s32 %s142, 1
    %s144 = scalar_select %p141, %s142, %s143
    %p147 = pneg %p141
    %p148 = scmp.eq.s32.totalorder %s22, 1
    %p149 = por %p147, %p148
    %p150 = scmp.ne.s32.totalorder %s142, %s145
    %p151 = scmp.eq.s32.totalorder %s22, 0
    %p152 = por %p150, %p151
    %p153 = scmp.ne.s32.totalorder %s142, %s145
    %p154 = scmp.eq.s32.totalorder %s27, 1
    %p155 = por %p153, %p154
    %p156 = scmp.ne.s32.totalorder %s145, %s146
    %p157 = scmp.eq.s32.totalorder %s27, 0
    %p158 = por %p156, %p157
    %p159 = scmp.ne.s32.totalorder %s145, %s146
    %p160 = scmp.eq.s32.totalorder %s28, 1
    %p161 = por %p159, %p160
    %p163 = scmp.ne.s32.totalorder %s146, %s162
    %p164 = scmp.eq.s32.totalorder %s28, 0
    %p165 = por %p163, %p164
    %s166 = ssub.s32 %s22, %s29
    %p167 = scmp.eq.s32.totalorder %s166, 0
    %s169 = sadd.s32 %s168, 1
    %s170 = scalar_select %p167, %s168, %s169
    %p173 = pneg %p167
    %p174 = scmp.eq.s32.totalorder %s22, 1
    %p175 = por %p173, %p174
    %p176 = scmp.ne.s32.totalorder %s168, %s171
    %p177 = scmp.eq.s32.totalorder %s22, 0
    %p178 = por %p176, %p177
    %p179 = scmp.ne.s32.totalorder %s168, %s171
    %p180 = scmp.eq.s32.totalorder %s27, 1
    %p181 = por %p179, %p180
    %p182 = scmp.ne.s32.totalorder %s171, %s172
    %p183 = scmp.eq.s32.totalorder %s27, 0
    %p184 = por %p182, %p183
    %p185 = scmp.ne.s32.totalorder %s171, %s172
    %p186 = scmp.eq.s32.totalorder %s28, 1
    %p187 = por %p185, %p186
    %p189 = scmp.ne.s32.totalorder %s172, %s188
    %p190 = scmp.eq.s32.totalorder %s28, 0
    %p191 = por %p189, %p190
    %s192 = ssub.s32 %s22, %s29
    %p193 = scmp.eq.s32.totalorder %s192, 0
    %s195 = sadd.s32 %s194, 1
    %s196 = scalar_select %p193, %s194, %s195
    %p199 = pneg %p193
    %p200 = scmp.eq.s32.totalorder %s22, 1
    %p201 = por %p199, %p200
    %p202 = scmp.ne.s32.totalorder %s194, %s197
    %p203 = scmp.eq.s32.totalorder %s22, 0
    %p204 = por %p202, %p203
    %p205 = scmp.ne.s32.totalorder %s194, %s197
    %p206 = scmp.eq.s32.totalorder %s27, 1
    %p207 = por %p205, %p206
    %p208 = scmp.ne.s32.totalorder %s197, %s198
    %p209 = scmp.eq.s32.totalorder %s27, 0
    %p210 = por %p208, %p209
    %p211 = scmp.ne.s32.totalorder %s197, %s198
    %p212 = scmp.eq.s32.totalorder %s28, 1
    %p213 = por %p211, %p212
    %p215 = scmp.ne.s32.totalorder %s198, %s214
    %p216 = scmp.eq.s32.totalorder %s28, 0
    %p217 = por %p215, %p216
    %s218 = ssub.s32 %s22, %s29
    %p219 = scmp.eq.s32.totalorder %s218, 0
    %s221 = sadd.s32 %s220, 1
    %s222 = scalar_select %p219, %s220, %s221
    %p225 = pneg %p219
    %p226 = scmp.eq.s32.totalorder %s22, 1
    %p227 = por %p225, %p226
    %p228 = scmp.ne.s32.totalorder %s220, %s223
    %p229 = scmp.eq.s32.totalorder %s22, 0
    %p230 = por %p228, %p229
    %p231 = scmp.ne.s32.totalorder %s220, %s223
    %p232 = scmp.eq.s32.totalorder %s27, 1
    %p233 = por %p231, %p232
    %p234 = scmp.ne.s32.totalorder %s223, %s224
    %p235 = scmp.eq.s32.totalorder %s27, 0
    %p236 = por %p234, %p235
    %p237 = scmp.ne.s32.totalorder %s223, %s224
    %p238 = scmp.eq.s32.totalorder %s28, 1
    %p239 = por %p237, %p238
    %p241 = scmp.ne.s32.totalorder %s224, %s240
    %p242 = scmp.eq.s32.totalorder %s28, 0
    %p243 = por %p241, %p242
    %s244 = ssub.s32 %s22, %s29
    %p245 = scmp.eq.s32.totalorder %s244, 0
    %s247 = sadd.s32 %s246, 1
    %s248 = scalar_select %p245, %s246, %s247
    %p251 = pneg %p245
    %p252 = scmp.eq.s32.totalorder %s22, 1
    %p253 = por %p251, %p252
    %p254 = scmp.ne.s32.totalorder %s246, %s249
    %p255 = scmp.eq.s32.totalorder %s22, 0
    %p256 = por %p254, %p255
    %p257 = scmp.ne.s32.totalorder %s246, %s249
    %p258 = scmp.eq.s32.totalorder %s27, 1
    %p259 = por %p257, %p258
    %p260 = scmp.ne.s32.totalorder %s249, %s250
    %p261 = scmp.eq.s32.totalorder %s27, 0
    %p262 = por %p260, %p261
    %p263 = scmp.ne.s32.totalorder %s249, %s250
    %p264 = scmp.eq.s32.totalorder %s28, 1
    %p265 = por %p263, %p264
    %p267 = scmp.ne.s32.totalorder %s250, %s266
    %p268 = scmp.eq.s32.totalorder %s28, 0
    %p269 = por %p267, %p268
    %s270 = ssub.s32 %s22, %s29
    %p271 = scmp.eq.s32.totalorder %s270, 0
    %s273 = sadd.s32 %s272, 1
    %s274 = scalar_select %p271, %s272, %s273
    %p277 = pneg %p271
    %p278 = scmp.eq.s32.totalorder %s22, 1
    %p279 = por %p277, %p278
    %p280 = scmp.ne.s32.totalorder %s272, %s275
    %p281 = scmp.eq.s32.totalorder %s22, 0
    %p282 = por %p280, %p281
    %p283 = scmp.ne.s32.totalorder %s272, %s275
    %p284 = scmp.eq.s32.totalorder %s27, 1
    %p285 = por %p283, %p284
    %p286 = scmp.ne.s32.totalorder %s275, %s276
    %p287 = scmp.eq.s32.totalorder %s27, 0
    %p288 = por %p286, %p287
    %p289 = scmp.ne.s32.totalorder %s275, %s276
    %p290 = scmp.eq.s32.totalorder %s28, 1
    %p291 = por %p289, %p290
    %p293 = scmp.ne.s32.totalorder %s276, %s292
    %p294 = scmp.eq.s32.totalorder %s28, 0
    %p295 = por %p293, %p294
    %s296 = ssub.s32 %s22, %s29
    %p297 = scmp.eq.s32.totalorder %s296, 0
    %s299 = sadd.s32 %s298, 1
    %s300 = scalar_select %p297, %s298, %s299
    %p303 = pneg %p297
    %p304 = scmp.eq.s32.totalorder %s22, 1
    %p305 = por %p303, %p304
    %p306 = scmp.ne.s32.totalorder %s298, %s301
    %p307 = scmp.eq.s32.totalorder %s22, 0
    %p308 = por %p306, %p307
    %p309 = scmp.ne.s32.totalorder %s298, %s301
    %p310 = scmp.eq.s32.totalorder %s27, 1
    %p311 = por %p309, %p310
    %p312 = scmp.ne.s32.totalorder %s301, %s302
    %p313 = scmp.eq.s32.totalorder %s27, 0
    %p314 = por %p312, %p313
    %p315 = scmp.ne.s32.totalorder %s301, %s302
    %p316 = scmp.eq.s32.totalorder %s28, 1
    %p317 = por %p315, %p316
    %p319 = scmp.ne.s32.totalorder %s302, %s318
    %p320 = scmp.eq.s32.totalorder %s28, 0
    %p321 = por %p319, %p320
    %s322 = ssub.s32 %s22, %s29
    %p323 = scmp.eq.s32.totalorder %s322, 0
    %s325 = sadd.s32 %s324, 1
    %s326 = scalar_select %p323, %s324, %s325
    %p329 = pneg %p323
    %p330 = scmp.eq.s32.totalorder %s22, 1
    %p331 = por %p329, %p330
    %p332 = scmp.ne.s32.totalorder %s324, %s327
    %p333 = scmp.eq.s32.totalorder %s22, 0
    %p334 = por %p332, %p333
    %p335 = scmp.ne.s32.totalorder %s324, %s327
    %p336 = scmp.eq.s32.totalorder %s27, 1
    %p337 = por %p335, %p336
    %p338 = scmp.ne.s32.totalorder %s327, %s328
    %p339 = scmp.eq.s32.totalorder %s27, 0
    %p340 = por %p338, %p339
    %p341 = scmp.ne.s32.totalorder %s327, %s328
    %p342 = scmp.eq.s32.totalorder %s28, 1
    %p343 = por %p341, %p342
    %p345 = scmp.ne.s32.totalorder %s328, %s344
    %p346 = scmp.eq.s32.totalorder %s28, 0
    %p347 = por %p345, %p346
    %s348 = ssub.s32 %s22, %s29
    %p349 = scmp.eq.s32.totalorder %s348, 0
    %s351 = sadd.s32 %s350, 1
    %s352 = scalar_select %p349, %s350, %s351
    %p355 = pneg %p349
    %p356 = scmp.eq.s32.totalorder %s22, 1
    %p357 = por %p355, %p356
    %p358 = scmp.ne.s32.totalorder %s350, %s353
    %p359 = scmp.eq.s32.totalorder %s22, 0
    %p360 = por %p358, %p359
    %p361 = scmp.ne.s32.totalorder %s350, %s353
    %p362 = scmp.eq.s32.totalorder %s27, 1
    %p363 = por %p361, %p362
    %p364 = scmp.ne.s32.totalorder %s353, %s354
    %p365 = scmp.eq.s32.totalorder %s27, 0
    %p366 = por %p364, %p365
    %p367 = scmp.ne.s32.totalorder %s353, %s354
    %p368 = scmp.eq.s32.totalorder %s28, 1
    %p369 = por %p367, %p368
    %p371 = scmp.ne.s32.totalorder %s354, %s370
    %p372 = scmp.eq.s32.totalorder %s28, 0
    %p373 = por %p371, %p372
    %s374 = ssub.s32 %s22, %s29
    %p375 = scmp.eq.s32.totalorder %s374, 0
    %s377 = sadd.s32 %s376, 1
    %s378 = scalar_select %p375, %s376, %s377
    %p381 = pneg %p375
    %p382 = scmp.eq.s32.totalorder %s22, 1
    %p383 = por %p381, %p382
    %p384 = scmp.ne.s32.totalorder %s376, %s379
    %p385 = scmp.eq.s32.totalorder %s22, 0
    %p386 = por %p384, %p385
    %p387 = scmp.ne.s32.totalorder %s376, %s379
    %p388 = scmp.eq.s32.totalorder %s27, 1
    %p389 = por %p387, %p388
    %p390 = scmp.ne.s32.totalorder %s379, %s380
    %p391 = scmp.eq.s32.totalorder %s27, 0
    %p392 = por %p390, %p391
    %p393 = scmp.ne.s32.totalorder %s379, %s380
    %p394 = scmp.eq.s32.totalorder %s28, 1
    %p395 = por %p393, %p394
    %p397 = scmp.ne.s32.totalorder %s380, %s396
    %p398 = scmp.eq.s32.totalorder %s28, 0
    %p399 = por %p397, %p398
    %s400 = ssub.s32 %s22, %s29
    %p401 = scmp.eq.s32.totalorder %s400, 0
    %s403 = sadd.s32 %s402, 1
    %s404 = scalar_select %p401, %s402, %s403
    %p407 = pneg %p401
    %p408 = scmp.eq.s32.totalorder %s22, 1
    %p409 = por %p407, %p408
    %p410 = scmp.ne.s32.totalorder %s402, %s405
    %p411 = scmp.eq.s32.totalorder %s22, 0
    %p412 = por %p410, %p411
    %p413 = scmp.ne.s32.totalorder %s402, %s405
    %p414 = scmp.eq.s32.totalorder %s27, 1
    %p415 = por %p413, %p414
    %p416 = scmp.ne.s32.totalorder %s405, %s406
    %p417 = scmp.eq.s32.totalorder %s27, 0
    %p418 = por %p416, %p417
    %p419 = scmp.ne.s32.totalorder %s405, %s406
    %p420 = scmp.eq.s32.totalorder %s28, 1
    %p421 = por %p419, %p420
    %p423 = scmp.ne.s32.totalorder %s406, %s422
    %p424 = scmp.eq.s32.totalorder %s28, 0
    %p425 = por %p423, %p424
    %s427 = sadd.s32 %s426, 1
    %p430 = scmp.eq.s32.totalorder %s22, 1
    %p431 = scmp.ne.s32.totalorder %s426, %s428
    %p432 = scmp.eq.s32.totalorder %s22, 0
    %p433 = por %p431, %p432
    %p434 = scmp.ne.s32.totalorder %s426, %s428
    %p435 = scmp.eq.s32.totalorder %s27, 1
    %p436 = por %p434, %p435
    %p437 = scmp.ne.s32.totalorder %s428, %s429
    %p438 = scmp.eq.s32.totalorder %s27, 0
    %p439 = por %p437, %p438
    %p440 = scmp.ne.s32.totalorder %s428, %s429
    %p441 = scmp.eq.s32.totalorder %s28, 1
    %p442 = por %p440, %p441
    %p444 = scmp.ne.s32.totalorder %s429, %s443
    %p445 = scmp.eq.s32.totalorder %s28, 0
    %p446 = por %p444, %p445
    %p447 = scmp.le.s32.totalorder 1, %s22
    %p448 = scmp.lt.s32.totalorder %s22, 3
    %p449 = pnand %p447, %p448
    %p450 = pneg %p449
    // Predicated region
    $region9: #{bert_classifier_forward.1} parent=5 // pred_check
      _
    $region10: #{bert_classifier_forward.1} parent=5 // pred_check_branch
      %452 = sbr.rel (%p449) target = $region12
    $region11: #{bert_classifier_forward.1} parent=5 // pred_region
      %s453 = ssub.s32 %s22, 1
      // Predicated region
      $region13: #{bert_classifier_forward.1} parent=11 // pred_check
        %p454 = pneg %p43
      $region14: #{bert_classifier_forward.1} parent=11 // pred_check_branch
        %456 = sbr.rel (%p454) target = $region16
      $region15: #{bert_classifier_forward.1} parent=11 // pred_region
        _
      $region16: #{bert_classifier_forward.1} parent=11 // pred_fallthru
        _
      // Predicated region
      $region17: #{bert_classifier_forward.1} parent=11 // pred_check
        %p457 = pneg %p64
      $region18: #{bert_classifier_forward.1} parent=11 // pred_check_branch
        %459 = sbr.rel (%p457) target = $region20
      $region19: #{bert_classifier_forward.1} parent=11 // pred_region
        _
      $region20: #{bert_classifier_forward.1} parent=11 // pred_fallthru
        _
      // Predicated region
      $region21: #{bert_classifier_forward.1} parent=11 // pred_check
        %p460 = pneg %p85
      $region22: #{bert_classifier_forward.1} parent=11 // pred_check_branch
        %462 = sbr.rel (%p460) target = $region24
      $region23: #{bert_classifier_forward.1} parent=11 // pred_region
        _
      $region24: #{bert_classifier_forward.1} parent=11 // pred_fallthru
        _
      // Predicated region
      $region25: #{bert_classifier_forward.1} parent=11 // pred_check
        %p463 = pneg %p106
      $region26: #{bert_classifier_forward.1} parent=11 // pred_check_branch
        %465 = sbr.rel (%p463) target = $region28
      $region27: #{bert_classifier_forward.1} parent=11 // pred_region
        _
      $region28: #{bert_classifier_forward.1} parent=11 // pred_fallthru
        _
    $region12: #{bert_classifier_forward.1} parent=5 // pred_fallthru
      _
    %p466 = scmp.lt.s32.totalorder %s22, 2
    // Predicated region
    $region29: #{bert_classifier_forward.1} parent=5 // pred_check
      %p467 = pneg %p466
    $region30: #{bert_classifier_forward.1} parent=5 // pred_check_branch
      %469 = sbr.rel (%p467) target = $region32
    $region31: #{bert_classifier_forward.1} parent=5 // pred_region
      // Predicated region
      $region33: #{bert_classifier_forward.1} parent=31 // pred_check
        %p470 = pneg %p126
      $region34: #{bert_classifier_forward.1} parent=31 // pred_check_branch
        %472 = sbr.rel (%p470) target = $region36
      $region35: #{bert_classifier_forward.1} parent=31 // pred_region
        %p473 = scmp.lt.s32.totalorder %s22, 1
        %s474 = scalar_select %p473, %s22, 1
        %s475 = smul.addr %s474, 4
        %s476 = smul.addr %s475, 4
        %s477 = scalar_lea.vmem %s4, %s476
      $region36: #{bert_classifier_forward.1} parent=31 // pred_fallthru
        _
      // Predicated region
      $region37: #{bert_classifier_forward.1} parent=31 // pred_check
        %p478 = pneg %p152
      $region38: #{bert_classifier_forward.1} parent=31 // pred_check_branch
        %480 = sbr.rel (%p478) target = $region40
      $region39: #{bert_classifier_forward.1} parent=31 // pred_region
        %p481 = scmp.lt.s32.totalorder %s22, 1
        %s482 = scalar_select %p481, %s22, 1
        %s483 = scalar_lea.vmem %s5, %s482
      $region40: #{bert_classifier_forward.1} parent=31 // pred_fallthru
        _
      // Predicated region
      $region41: #{bert_classifier_forward.1} parent=31 // pred_check
        %p484 = pneg %p178
      $region42: #{bert_classifier_forward.1} parent=31 // pred_check_branch
        %486 = sbr.rel (%p484) target = $region44
      $region43: #{bert_classifier_forward.1} parent=31 // pred_region
        %p487 = scmp.lt.s32.totalorder %s22, 1
        %s488 = scalar_select %p487, %s22, 1
        %s489 = smul.addr %s488, 4
        %s490 = smul.addr %s489, 4
        %s491 = scalar_lea.vmem %s6, %s490
      $region44: #{bert_classifier_forward.1} parent=31 // pred_fallthru
        _
      // Predicated region
      $region45: #{bert_classifier_forward.1} parent=31 // pred_check
        %p492 = pneg %p204
      $region46: #{bert_classifier_forward.1} parent=31 // pred_check_branch
        %494 = sbr.rel (%p492) target = $region48
      $region47: #{bert_classifier_forward.1} parent=31 // pred_region
        %p495 = scmp.lt.s32.totalorder %s22, 1
        %s496 = scalar_select %p495, %s22, 1
        %s497 = scalar_lea.vmem %s7, %s496
      $region48: #{bert_classifier_forward.1} parent=31 // pred_fallthru
        _
      // Predicated region
      $region49: #{bert_classifier_forward.1} parent=31 // pred_check
        %p498 = pneg %p230
      $region50: #{bert_classifier_forward.1} parent=31 // pred_check_branch
        %500 = sbr.rel (%p498) target = $region52
      $region51: #{bert_classifier_forward.1} parent=31 // pred_region
        %p501 = scmp.lt.s32.totalorder %s22, 1
        %s502 = scalar_select %p501, %s22, 1
        %s503 = scalar_lea.vmem %s8, %s502
      $region52: #{bert_classifier_forward.1} parent=31 // pred_fallthru
        _
      // Predicated region
      $region53: #{bert_classifier_forward.1} parent=31 // pred_check
        %p504 = pneg %p256
      $region54: #{bert_classifier_forward.1} parent=31 // pred_check_branch
        %506 = sbr.rel (%p504) target = $region56
      $region55: #{bert_classifier_forward.1} parent=31 // pred_region
        %p507 = scmp.lt.s32.totalorder %s22, 1
        %s508 = scalar_select %p507, %s22, 1
        %s509 = scalar_lea.vmem %s9, %s508
      $region56: #{bert_classifier_forward.1} parent=31 // pred_fallthru
        _
      // Predicated region
      $region57: #{bert_classifier_forward.1} parent=31 // pred_check
        %p510 = pneg %p282
      $region58: #{bert_classifier_forward.1} parent=31 // pred_check_branch
        %512 = sbr.rel (%p510) target = $region60
      $region59: #{bert_classifier_forward.1} parent=31 // pred_region
        %p513 = scmp.lt.s32.totalorder %s22, 1
        %s514 = scalar_select %p513, %s22, 1
        %s515 = smul.addr %s514, 4
        %s516 = smul.addr %s515, 4
        %s517 = scalar_lea.vmem %s10, %s516
      $region60: #{bert_classifier_forward.1} parent=31 // pred_fallthru
        _
      // Predicated region
      $region61: #{bert_classifier_forward.1} parent=31 // pred_check
        %p518 = pneg %p308
      $region62: #{bert_classifier_forward.1} parent=31 // pred_check_branch
        %520 = sbr.rel (%p518) target = $region64
      $region63: #{bert_classifier_forward.1} parent=31 // pred_region
        %p521 = scmp.lt.s32.totalorder %s22, 1
        %s522 = scalar_select %p521, %s22, 1
        %s523 = scalar_lea.vmem %s11, %s522
      $region64: #{bert_classifier_forward.1} parent=31 // pred_fallthru
        _
      // Predicated region
      $region65: #{bert_classifier_forward.1} parent=31 // pred_check
        %p524 = pneg %p334
      $region66: #{bert_classifier_forward.1} parent=31 // pred_check_branch
        %526 = sbr.rel (%p524) target = $region68
      $region67: #{bert_classifier_forward.1} parent=31 // pred_region
        %p527 = scmp.lt.s32.totalorder %s22, 1
        %s528 = scalar_select %p527, %s22, 1
        %s529 = smul.addr %s528, 8
        %s530 = smul.addr %s529, 4
        %s531 = scalar_lea.vmem %s12, %s530
      $region68: #{bert_classifier_forward.1} parent=31 // pred_fallthru
        _
      // Predicated region
      $region69: #{bert_classifier_forward.1} parent=31 // pred_check
        %p532 = pneg %p360
      $region70: #{bert_classifier_forward.1} parent=31 // pred_check_branch
        %534 = sbr.rel (%p532) target = $region72
      $region71: #{bert_classifier_forward.1} parent=31 // pred_region
        %p535 = scmp.lt.s32.totalorder %s22, 1
        %s536 = scalar_select %p535, %s22, 1
        %s537 = scalar_lea.vmem %s13, %s536
      $region72: #{bert_classifier_forward.1} parent=31 // pred_fallthru
        _
      // Predicated region
      $region73: #{bert_classifier_forward.1} parent=31 // pred_check
        %p538 = pneg %p386
      $region74: #{bert_classifier_forward.1} parent=31 // pred_check_branch
        %540 = sbr.rel (%p538) target = $region76
      $region75: #{bert_classifier_forward.1} parent=31 // pred_region
        %p541 = scmp.lt.s32.totalorder %s22, 1
        %s542 = scalar_select %p541, %s22, 1
        %s543 = scalar_lea.vmem %s14, %s542
      $region76: #{bert_classifier_forward.1} parent=31 // pred_fallthru
        _
      // Predicated region
      $region77: #{bert_classifier_forward.1} parent=31 // pred_check
        %p544 = pneg %p412
      $region78: #{bert_classifier_forward.1} parent=31 // pred_check_branch
        %546 = sbr.rel (%p544) target = $region80
      $region79: #{bert_classifier_forward.1} parent=31 // pred_region
        %p547 = scmp.lt.s32.totalorder %s22, 1
        %s548 = scalar_select %p547, %s22, 1
        %s549 = scalar_lea.vmem %s15, %s548
      $region80: #{bert_classifier_forward.1} parent=31 // pred_fallthru
        _
    $region32: #{bert_classifier_forward.1} parent=5 // pred_fallthru
      _
    %p550 = scmp.le.s32.totalorder 1, %s22
    %p551 = scmp.lt.s32.totalorder %s22, 3
    %p552 = pnand %p550, %p551
    %p553 = pneg %p552
    // Predicated region
    $region81: #{bert_classifier_forward.1} parent=5 // pred_check
      _
    $region82: #{bert_classifier_forward.1} parent=5 // pred_check_branch
      %555 = sbr.rel (%p552) target = $region84
    $region83: #{bert_classifier_forward.1} parent=5 // pred_region
      %s556 = ssub.s32 %s22, 1
      %p557 = pneg %p43
      %p558 = pneg %p40
      %p559 = pneg %p64
      %p560 = pneg %p61
      %p561 = pneg %p85
      %p562 = pneg %p82
      %p563 = pneg %p106
      %p564 = pneg %p103
      %p565 = scmp.lt.s32.totalorder %s27, 1
      %s566 = scalar_select %p565, %s27, 1
      %s567 = smul.addr %s566, 4
      %s568 = smul.addr %s567, 4
      %s569 = scalar_lea.vmem %s4, %s568
      %p570 = pneg %p132
      %p571 = pneg %p129
      %p572 = scmp.lt.s32.totalorder %s27, 1
      %s573 = scalar_select %p572, %s27, 1
      %s574 = scalar_lea.vmem %s5, %s573
      %p575 = pneg %p158
      %p576 = pneg %p155
      %p577 = scmp.lt.s32.totalorder %s27, 1
      %s578 = scalar_select %p577, %s27, 1
      %s579 = smul.addr %s578, 4
      %s580 = smul.addr %s579, 4
      %s581 = scalar_lea.vmem %s6, %s580
      %p582 = pneg %p184
      %p583 = pneg %p181
      %p584 = scmp.lt.s32.totalorder %s27, 1
      %s585 = scalar_select %p584, %s27, 1
      %s586 = scalar_lea.vmem %s7, %s585
      %p587 = pneg %p210
      %p588 = pneg %p207
      %p589 = scmp.lt.s32.totalorder %s27, 1
      %s590 = scalar_select %p589, %s27, 1
      %s591 = scalar_lea.vmem %s8, %s590
      %p592 = pneg %p236
      %p593 = pneg %p233
      %p594 = scmp.lt.s32.totalorder %s27, 1
      %s595 = scalar_select %p594, %s27, 1
      %s596 = scalar_lea.vmem %s9, %s595
      %p597 = pneg %p262
      %p598 = pneg %p259
      %p599 = scmp.lt.s32.totalorder %s27, 1
      %s600 = scalar_select %p599, %s27, 1
      %s601 = smul.addr %s600, 4
      %s602 = smul.addr %s601, 4
      %s603 = scalar_lea.vmem %s10, %s602
      %p604 = pneg %p288
      %p605 = pneg %p285
      %p606 = scmp.lt.s32.totalorder %s27, 1
      %s607 = scalar_select %p606, %s27, 1
      %s608 = scalar_lea.vmem %s11, %s607
      %p609 = pneg %p314
      %p610 = pneg %p311
      %p611 = scmp.lt.s32.totalorder %s27, 1
      %s612 = scalar_select %p611, %s27, 1
      %s613 = smul.addr %s612, 8
      %s614 = smul.addr %s613, 4
      %s615 = scalar_lea.vmem %s12, %s614
      %p616 = pneg %p340
      %p617 = pneg %p337
      %p618 = scmp.lt.s32.totalorder %s27, 1
      %s619 = scalar_select %p618, %s27, 1
      %s620 = scalar_lea.vmem %s13, %s619
      %p621 = pneg %p366
      %p622 = pneg %p363
      %p623 = scmp.lt.s32.totalorder %s27, 1
      %s624 = scalar_select %p623, %s27, 1
      %s625 = scalar_lea.vmem %s14, %s624
      %p626 = pneg %p392
      %p627 = pneg %p389
      %p628 = scmp.lt.s32.totalorder %s27, 1
      %s629 = scalar_select %p628, %s27, 1
      %s630 = scalar_lea.vmem %s15, %s629
      %p631 = pneg %p418
      %p632 = pneg %p415
      %p633 = pneg %p439
      %p634 = pneg %p436
      %p635 = scmp.lt.s32.totalorder %s27, 1
      %s636 = scalar_select %p635, %s27, 1
      %s637 = smul.addr %s636, 4
      %s638 = smul.addr %s637, 4
      %s639 = scalar_lea.vmem %s4, %s638
      %p640 = scmp.lt.s32.totalorder %s27, 1
      %s641 = scalar_select %p640, %s27, 1
      %s642 = scalar_lea.vmem %s5, %s641
      %p643 = scmp.lt.s32.totalorder %s27, 1
      %s644 = scalar_select %p643, %s27, 1
      %s645 = smul.addr %s644, 4
      %s646 = smul.addr %s645, 4
      %s647 = scalar_lea.vmem %s6, %s646
      %p648 = scmp.lt.s32.totalorder %s27, 1
      %s649 = scalar_select %p648, %s27, 1
      %s650 = scalar_lea.vmem %s7, %s649
      %p651 = scmp.lt.s32.totalorder %s27, 1
      %s652 = scalar_select %p651, %s27, 1
      %s653 = scalar_lea.vmem %s8, %s652
      %p654 = scmp.lt.s32.totalorder %s27, 1
      %s655 = scalar_select %p654, %s27, 1
      %s656 = scalar_lea.vmem %s9, %s655
      %p657 = scmp.lt.s32.totalorder %s27, 1
      %s658 = scalar_select %p657, %s27, 1
      %s659 = smul.addr %s658, 4
      %s660 = smul.addr %s659, 4
      %s661 = scalar_lea.vmem %s10, %s660
      %p662 = scmp.lt.s32.totalorder %s27, 1
      %s663 = scalar_select %p662, %s27, 1
      %s664 = scalar_lea.vmem %s11, %s663
      %p665 = scmp.lt.s32.totalorder %s27, 1
      %s666 = scalar_select %p665, %s27, 1
      %s667 = smul.addr %s666, 8
      %s668 = smul.addr %s667, 4
      %s669 = scalar_lea.vmem %s12, %s668
      %p670 = scmp.lt.s32.totalorder %s27, 1
      %s671 = scalar_select %p670, %s27, 1
      %s672 = scalar_lea.vmem %s13, %s671
      %p673 = scmp.lt.s32.totalorder %s27, 1
      %s674 = scalar_select %p673, %s27, 1
      %s675 = scalar_lea.vmem %s14, %s674
      %p676 = scmp.lt.s32.totalorder %s27, 1
      %s677 = scalar_select %p676, %s27, 1
      %s678 = scalar_lea.vmem %s15, %s677
      %p680 = scmp.eq.s32.totalorder %s27, 0
      // Predicated region
      $region85: #{bert_classifier_forward.1} parent=83 // pred_check
        %p681 = pneg %p680
      $region86: #{bert_classifier_forward.1} parent=83 // pred_check_branch
        %683 = sbr.rel (%p681) target = $region88
      $region87: #{bert_classifier_forward.1} parent=83 // pred_region
        %v684 = vld [vmem:[%s0] sm:$0xff]
        %v685 = vld [vmem:[%s0 + $0x8] sm:$0xff]
        %v686 = vld [vmem:[%s2] sm:$0x1]
        %v687 = vld [vmem:[%s3] sm:$0x1]
        %vm688 = vcmask 261120
        %v689 = vsel %vm688, %v684, 0.0
        %690 = vadd.xlane.f32.xlu0 %v689
        %v691 = vpop.xlane.xlu0 %690
        %v692 = vsel %vm688, %v685, 0.0
        %693 = vadd.xlane.f32.xlu0 %v692
        %v694 = vpop.xlane.xlu0 %693
        %v695 = vrcp.pop 32.0
        %v696 = vmul.f32 32.0, %v695
        %v697 = vsub.f32 1.0, %v696
        %v698 = vmul.f32 %v695, %v697
        %v699 = vadd.f32 %v695, %v698
        %vm700 = vweird.f32 %v695
        %v701 = vsel %vm700, %v695, %v699
        %v702 = vmul.f32 %v691, %v701
        %v703 = vmul.f32 %v694, %v701
        %v704 = vsub.f32 %v684, %v702
        %v705 = vsub.f32 %v685, %v703
        %v706 = vmul.f32 %v704, %v704
        %v707 = vmul.f32 %v705, %v705
        %v708 = vsel %vm688, %v706, 0.0
        %709 = vadd.xlane.f32.xlu0 %v708
        %v710 = vpop.xlane.xlu0 %709
        %v711 = vsel %vm688, %v707, 0.0
        %712 = vadd.xlane.f32.xlu0 %v711
        %v713 = vpop.xlane.xlu0 %712
        %v714 = vmul.f32 %v710, %v701
        %v715 = vmul.f32 %v713, %v701
        %v716 = vadd.f32 %v714, 1e-12
        %v717 = vadd.f32 %v715, 1e-12
        %v718 = vrsqrt.pop %v716
        %v719 = vmul.f32 %v718, %v716
        %v720 = vmul.f32 %v719, %v718
        %v721 = vmul.f32 0.5, %v720
        %v722 = vsub.f32 1.5, %v721
        %v723 = vmul.f32 %v718, %v722
        %vm724 = vweird.f32 %v716
        %vm725 = vweird.f32 %v718
        %vm726 = vmor %vm724, %vm725
        %v727 = vsel %vm726, %v718, %v723
        %v728 = vrsqrt.pop %v717
        %v729 = vmul.f32 %v728, %v717
        %v730 = vmul.f32 %v729, %v728
        %v731 = vmul.f32 0.5, %v730
        %v732 = vsub.f32 1.5, %v731
        %v733 = vmul.f32 %v728, %v732
        %vm734 = vweird.f32 %v717
        %vm735 = vweird.f32 %v728
        %vm736 = vmor %vm734, %vm735
        %v737 = vsel %vm736, %v728, %v733
        %v738 = vmul.f32 %v704, %v727
        %v739 = vmul.f32 %v705, %v737
        %v741 = vperm.slane %v686, 0
        %v743 = vmul.f32 %v738, %v741
        %v744 = vmul.f32 %v739, %v741
        %v746 = vperm.slane %v687, 0
        %v748 = vadd.f32 %v743, %v746
        %v749 = vadd.f32 %v744, %v746
        %750 = vst.msk [vmem:[#allocation2] sm:$0xff] %vm688, %v748
        %751 = vst.msk [vmem:[#allocation2 + $0x8] sm:$0xff] %vm688, %v749
      $region88: #{bert_classifier_forward.1} parent=83 // pred_fallthru
        _
      %v752 = vld [vmem:[#allocation2] sm:$0xff]
      %v753 = vld [vmem:[#allocation2 + $0x8] sm:$0xff]
      %v754 = vpack.c.bf16 %v753, %v752
      %v755 = vld [vmem:[%s639] sm:$0xf]
      %v756 = vld [vmem:[%s639 + $0x4] sm:$0xf]
      %v757 = vld [vmem:[%s639 + $0x8] sm:$0xf]
      %v758 = vld [vmem:[%s639 + $0xc] sm:$0xf]
      %v759 = vld [vmem:[%s642] sm:$0x1]
      %v761 = vperm.slane %v759, 0
      %v767 = vunpack.c.l.b16 %v755
      %v768 = vunpack.c.l.b16 %v756
      %v769 = vunpack.c.l.b16 %v757
      %v770 = vunpack.c.l.b16 %v758
      %v771 = vpack.c.b16 %v768, %v767
      %v772 = vpack.c.b16 %v770, %v769
      %vm775 = vcmask 261120
      %v777 = vsel %vm775, %v754, 0
      %779 = vmatpush.bf16.msra.mxu0 0
      %780 = vmatpush.bf16.msra.mxu0 0
      %781 = vmatpush.bf16.msra.mxu0 0
      %782 = vmatpush.bf16.msra.mxu0 0
      %783 = vmatpush.bf16.msra.mxu0 0
      %784 = vmatpush.bf16.msra.mxu0 0
      %785 = vmatpush.bf16.msra.mxu0 %v772
      %786 = vmatpush.bf16.msra.mxu0 %v771
      %787 = vmatmul.bf16.gmra.mxu0 %v777
      %v788 = vpop.f32.mrf.mxu0
      %v789 = vadd.f32 %v761, %v788
      %v790 = vpop.f32.mrf.mxu0
      %v791 = vadd.f32 %v761, %v790
      %792 = vdwg.mxu0
      %v793 = vld [vmem:[%s1] sm:$0x3]
      %v795 = vrot.slane %v793, 1
      %v796 = vpack.c.bf16 %v789, %v789
      %v797 = vpack.c.bf16 %v791, %v791
      %v799 = vunpack.c.l.b16 %v796
      %v800 = vpack.c.b16 %v799, %v799
      %801 = vrot.lane.b32.xlu0 %v800, 96
      %v802 = vpop.permute.xlu0 %801
      %vm803 = vcmask 64512
      %v805 = vsel %vm803, %v796, 0
      %v808 = vsel %vm803, %v802, 0
      %810 = vmatpush.bf16.xpose.msra.mxu0 0
      %811 = vmatpush.bf16.xpose.msra.mxu0 0
      %812 = vmatpush.bf16.xpose.msra.mxu0 0
      %813 = vmatpush.bf16.xpose.msra.mxu0 0
      %814 = vmatpush.bf16.xpose.msra.mxu0 0
      %815 = vmatpush.bf16.xpose.msra.mxu0 0
      %816 = vmatpush.bf16.xpose.msra.mxu0 0
      %817 = vmatpush.bf16.xpose.msra.mxu0 %v808
      %818 = vmatmul.bf16.gmra.mxu0 %v805
      %v819 = vpop.f32.mrf.mxu0
      %v820 = vadd.f32 0.0, %v819
      %v821 = vpop.f32.mrf.mxu0
      %822 = vdwg.mxu0
      %v824 = vunpack.c.l.b16 %v797
      %v825 = vpack.c.b16 %v824, %v824
      %826 = vrot.lane.b32.xlu0 %v825, 96
      %v827 = vpop.permute.xlu0 %826
      %v829 = vsel %vm803, %v797, 0
      %v832 = vsel %vm803, %v827, 0
      %834 = vmatpush.bf16.xpose.msra.mxu0 0
      %835 = vmatpush.bf16.xpose.msra.mxu0 0
      %836 = vmatpush.bf16.xpose.msra.mxu0 0
      %837 = vmatpush.bf16.xpose.msra.mxu0 0
      %838 = vmatpush.bf16.xpose.msra.mxu0 0
      %839 = vmatpush.bf16.xpose.msra.mxu0 0
      %840 = vmatpush.bf16.xpose.msra.mxu0 0
      %841 = vmatpush.bf16.xpose.msra.mxu0 %v832
      %842 = vmatmul.bf16.gmra.mxu0 %v829
      %v843 = vpop.f32.mrf.mxu0
      %v844 = vadd.f32 0.0, %v843
      %v845 = vpop.f32.mrf.mxu0
      %846 = vdwg.mxu0
      %v847 = vmul.f32 %v820, 0.35355338
      %v848 = vmul.f32 %v844, 0.35355338
      %v849 = vperm.slane %v793, 0
      %v850 = vperm.slane %v795, 0
      %v853 = vadd.f32 %v847, %v849
      %v854 = vadd.f32 %v848, %v850
      %v855 = vsel %vm803, %v853, -inf
      %856 = vmax.xlane.f32.xlu0 %v855
      %v857 = vpop.xlane.xlu0 %856
      %v858 = vsel %vm803, %v854, -inf
      %859 = vmax.xlane.f32.xlu0 %v858
      %v860 = vpop.xlane.xlu0 %859
      %v861 = vsub.f32 %v853, %v857
      %v862 = vsub.f32 %v854, %v860
      %v863 = vmul.f32 %v861, 1.442695
      %v864 = vpow.pop %v863
      %v865 = vmul.f32 %v862, 1.442695
      %v866 = vpow.pop %v865
      %v867 = vsel %vm803, %v864, 0.0
      %868 = vadd.xlane.f32.xlu0 %v867
      %v869 = vpop.xlane.xlu0 %868
      %v870 = vsel %vm803, %v866, 0.0
      %871 = vadd.xlane.f32.xlu0 %v870
      %v872 = vpop.xlane.xlu0 %871
      %v873 = vrcp.pop %v869
      %v874 = vrcp.pop %v872
      %v875 = vmul.f32 %v864, %v873
      %v876 = vmul.f32 %v866, %v874
      %v877 = vpack.c.bf16 %v875, %v875
      %v878 = vpack.c.bf16 %v876, %v876
      %879 = vrot.lane.b32.xlu0 %v800, 64
      %v880 = vpop.permute.xlu0 %879
      %v882 = vsel %vm803, %v877, 0
      %vm884 = vcmask 1043456
      %v886 = vsel %vm884, %v880, 0
      %888 = vmatpush.bf16.msra.mxu0 0
      %889 = vmatpush.bf16.msra.mxu0 0
      %890 = vmatpush.bf16.msra.mxu0 0
      %891 = vmatpush.bf16.msra.mxu0 0
      %892 = vmatpush.bf16.msra.mxu0 0
      %893 = vmatpush.bf16.msra.mxu0 0
      %894 = vmatpush.bf16.msra.mxu0 0
      %895 = vmatpush.bf16.msra.mxu0 %v886
      %896 = vmatmul.bf16.gmra.mxu0 %v882
      %v897 = vpop.f32.mrf.mxu0
      %v898 = vadd.f32 0.0, %v897
      %v899 = vpop.f32.mrf.mxu0
      %900 = vdwg.mxu0
      %901 = vrot.lane.b32.xlu0 %v825, 64
      %v902 = vpop.permute.xlu0 %901
      %v904 = vsel %vm803, %v878, 0
      %v907 = vsel %vm884, %v902, 0
      %909 = vmatpush.bf16.msra.mxu0 0
      %910 = vmatpush.bf16.msra.mxu0 0
      %911 = vmatpush.bf16.msra.mxu0 0
      %912 = vmatpush.bf16.msra.mxu0 0
      %913 = vmatpush.bf16.msra.mxu0 0
      %914 = vmatpush.bf16.msra.mxu0 0
      %915 = vmatpush.bf16.msra.mxu0 0
      %916 = vmatpush.bf16.msra.mxu0 %v907
      %917 = vmatmul.bf16.gmra.mxu0 %v904
      %v918 = vpop.f32.mrf.mxu0
      %v919 = vadd.f32 0.0, %v918
      %v920 = vpop.f32.mrf.mxu0
      %921 = vdwg.mxu0
      %922 = vrot.lane.b32.xlu0 %v800, 120
      %v923 = vpop.permute.xlu0 %922
      %924 = vrot.lane.b32.xlu0 %v800, 88
      %v925 = vpop.permute.xlu0 %924
      %v927 = vsel %vm803, %v923, 0
      %v930 = vsel %vm803, %v925, 0
      %932 = vmatpush.bf16.xpose.msra.mxu0 0
      %933 = vmatpush.bf16.xpose.msra.mxu0 0
      %934 = vmatpush.bf16.xpose.msra.mxu0 0
      %935 = vmatpush.bf16.xpose.msra.mxu0 0
      %936 = vmatpush.bf16.xpose.msra.mxu0 0
      %937 = vmatpush.bf16.xpose.msra.mxu0 0
      %938 = vmatpush.bf16.xpose.msra.mxu0 0
      %939 = vmatpush.bf16.xpose.msra.mxu0 %v930
      %940 = vmatmul.bf16.gmra.mxu0 %v927
      %v941 = vpop.f32.mrf.mxu0
      %v942 = vadd.f32 0.0, %v941
      %v943 = vpop.f32.mrf.mxu0
      %944 = vdwg.mxu0
      %945 = vrot.lane.b32.xlu0 %v825, 120
      %v946 = vpop.permute.xlu0 %945
      %947 = vrot.lane.b32.xlu0 %v825, 88
      %v948 = vpop.permute.xlu0 %947
      %v950 = vsel %vm803, %v946, 0
      %v953 = vsel %vm803, %v948, 0
      %955 = vmatpush.bf16.xpose.msra.mxu0 0
      %956 = vmatpush.bf16.xpose.msra.mxu0 0
      %957 = vmatpush.bf16.xpose.msra.mxu0 0
      %958 = vmatpush.bf16.xpose.msra.mxu0 0
      %959 = vmatpush.bf16.xpose.msra.mxu0 0
      %960 = vmatpush.bf16.xpose.msra.mxu0 0
      %961 = vmatpush.bf16.xpose.msra.mxu0 0
      %962 = vmatpush.bf16.xpose.msra.mxu0 %v953
      %963 = vmatmul.bf16.gmra.mxu0 %v950
      %v964 = vpop.f32.mrf.mxu0
      %v965 = vadd.f32 0.0, %v964
      %v966 = vpop.f32.mrf.mxu0
      %967 = vdwg.mxu0
      %v968 = vmul.f32 %v942, 0.35355338
      %v969 = vmul.f32 %v965, 0.35355338
      %v970 = vadd.f32 %v968, %v849
      %v971 = vadd.f32 %v969, %v850
      %v972 = vsel %vm803, %v970, -inf
      %973 = vmax.xlane.f32.xlu0 %v972
      %v974 = vpop.xlane.xlu0 %973
      %v975 = vsel %vm803, %v971, -inf
      %976 = vmax.xlane.f32.xlu0 %v975
      %v977 = vpop.xlane.xlu0 %976
      %v978 = vsub.f32 %v970, %v974
      %v979 = vsub.f32 %v971, %v977
      %v980 = vmul.f32 %v978, 1.442695
      %v981 = vpow.pop %v980
      %v982 = vmul.f32 %v979, 1.442695
      %v983 = vpow.pop %v982
      %v984 = vsel %vm803, %v981, 0.0
      %985 = vadd.xlane.f32.xlu0 %v984
      %v986 = vpop.xlane.xlu0 %985
      %v987 = vsel %vm803, %v983, 0.0
      %988 = vadd.xlane.f32.xlu0 %v987
      %v989 = vpop.xlane.xlu0 %988
      %v990 = vrcp.pop %v986
      %v991 = vrcp.pop %v989
      %v992 = vmul.f32 %v981, %v990
      %v993 = vmul.f32 %v983, %v991
      %v994 = vpack.c.bf16 %v992, %v992
      %v995 = vpack.c.bf16 %v993, %v993
      %996 = vrot.lane.b32.xlu0 %v800, 56
      %v997 = vpop.permute.xlu0 %996
      %v999 = vsel %vm803, %v994, 0
      %v1002 = vsel %vm884, %v997, 0
      %1004 = vmatpush.bf16.msra.mxu0 0
      %1005 = vmatpush.bf16.msra.mxu0 0
      %1006 = vmatpush.bf16.msra.mxu0 0
      %1007 = vmatpush.bf16.msra.mxu0 0
      %1008 = vmatpush.bf16.msra.mxu0 0
      %1009 = vmatpush.bf16.msra.mxu0 0
      %1010 = vmatpush.bf16.msra.mxu0 0
      %1011 = vmatpush.bf16.msra.mxu0 %v1002
      %1012 = vmatmul.bf16.gmra.mxu0 %v999
      %v1013 = vpop.f32.mrf.mxu0
      %v1014 = vadd.f32 0.0, %v1013
      %v1015 = vpop.f32.mrf.mxu0
      %1016 = vdwg.mxu0
      %1017 = vrot.lane.b32.xlu0 %v825, 56
      %v1018 = vpop.permute.xlu0 %1017
      %v1020 = vsel %vm803, %v995, 0
      %v1023 = vsel %vm884, %v1018, 0
      %1025 = vmatpush.bf16.msra.mxu0 0
      %1026 = vmatpush.bf16.msra.mxu0 0
      %1027 = vmatpush.bf16.msra.mxu0 0
      %1028 = vmatpush.bf16.msra.mxu0 0
      %1029 = vmatpush.bf16.msra.mxu0 0
      %1030 = vmatpush.bf16.msra.mxu0 0
      %1031 = vmatpush.bf16.msra.mxu0 0
      %1032 = vmatpush.bf16.msra.mxu0 %v1023
      %1033 = vmatmul.bf16.gmra.mxu0 %v1020
      %v1034 = vpop.f32.mrf.mxu0
      %v1035 = vadd.f32 0.0, %v1034
      %v1036 = vpop.f32.mrf.mxu0
      %1037 = vdwg.mxu0
      %1038 = vrot.lane.b32.xlu0 %v800, 112
      %v1039 = vpop.permute.xlu0 %1038
      %1040 = vrot.lane.b32.xlu0 %v800, 80
      %v1041 = vpop.permute.xlu0 %1040
      %v1043 = vsel %vm803, %v1039, 0
      %v1046 = vsel %vm803, %v1041, 0
      %1048 = vmatpush.bf16.xpose.msra.mxu0 0
      %1049 = vmatpush.bf16.xpose.msra.mxu0 0
      %1050 = vmatpush.bf16.xpose.msra.mxu0 0
      %1051 = vmatpush.bf16.xpose.msra.mxu0 0
      %1052 = vmatpush.bf16.xpose.msra.mxu0 0
      %1053 = vmatpush.bf16.xpose.msra.mxu0 0
      %1054 = vmatpush.bf16.xpose.msra.mxu0 0
      %1055 = vmatpush.bf16.xpose.msra.mxu0 %v1046
      %1056 = vmatmul.bf16.gmra.mxu0 %v1043
      %v1057 = vpop.f32.mrf.mxu0
      %v1058 = vadd.f32 0.0, %v1057
      %v1059 = vpop.f32.mrf.mxu0
      %1060 = vdwg.mxu0
      %1061 = vrot.lane.b32.xlu0 %v825, 112
      %v1062 = vpop.permute.xlu0 %1061
      %1063 = vrot.lane.b32.xlu0 %v825, 80
      %v1064 = vpop.permute.xlu0 %1063
      %v1066 = vsel %vm803, %v1062, 0
      %v1069 = vsel %vm803, %v1064, 0
      %1071 = vmatpush.bf16.xpose.msra.mxu0 0
      %1072 = vmatpush.bf16.xpose.msra.mxu0 0
      %1073 = vmatpush.bf16.xpose.msra.mxu0 0
      %1074 = vmatpush.bf16.xpose.msra.mxu0 0
      %1075 = vmatpush.bf16.xpose.msra.mxu0 0
      %1076 = vmatpush.bf16.xpose.msra.mxu0 0
      %1077 = vmatpush.bf16.xpose.msra.mxu0 0
      %1078 = vmatpush.bf16.xpose.msra.mxu0 %v1069
      %1079 = vmatmul.bf16.gmra.mxu0 %v1066
      %v1080 = vpop.f32.mrf.mxu0
      %v1081 = vadd.f32 0.0, %v1080
      %v1082 = vpop.f32.mrf.mxu0
      %1083 = vdwg.mxu0
      %v1084 = vmul.f32 %v1058, 0.35355338
      %v1085 = vmul.f32 %v1081, 0.35355338
      %v1086 = vadd.f32 %v1084, %v849
      %v1087 = vadd.f32 %v1085, %v850
      %v1088 = vsel %vm803, %v1086, -inf
      %1089 = vmax.xlane.f32.xlu0 %v1088
      %v1090 = vpop.xlane.xlu0 %1089
      %v1091 = vsel %vm803, %v1087, -inf
      %1092 = vmax.xlane.f32.xlu0 %v1091
      %v1093 = vpop.xlane.xlu0 %1092
      %v1094 = vsub.f32 %v1086, %v1090
      %v1095 = vsub.f32 %v1087, %v1093
      %v1096 = vmul.f32 %v1094, 1.442695
      %v1097 = vpow.pop %v1096
      %v1098 = vmul.f32 %v1095, 1.442695
      %v1099 = vpow.pop %v1098
      %v1100 = vsel %vm803, %v1097, 0.0
      %1101 = vadd.xlane.f32.xlu0 %v1100
      %v1102 = vpop.xlane.xlu0 %1101
      %v1103 = vsel %vm803, %v1099, 0.0
      %1104 = vadd.xlane.f32.xlu0 %v1103
      %v1105 = vpop.xlane.xlu0 %1104
      %v1106 = vrcp.pop %v1102
      %v1107 = vrcp.pop %v1105
      %v1108 = vmul.f32 %v1097, %v1106
      %v1109 = vmul.f32 %v1099, %v1107
      %v1110 = vpack.c.bf16 %v1108, %v1108
      %v1111 = vpack.c.bf16 %v1109, %v1109
      %1112 = vrot.lane.b32.xlu0 %v800, 48
      %v1113 = vpop.permute.xlu0 %1112
      %v1115 = vsel %vm803, %v1110, 0
      %v1118 = vsel %vm884, %v1113, 0
      %1120 = vmatpush.bf16.msra.mxu0 0
      %1121 = vmatpush.bf16.msra.mxu0 0
      %1122 = vmatpush.bf16.msra.mxu0 0
      %1123 = vmatpush.bf16.msra.mxu0 0
      %1124 = vmatpush.bf16.msra.mxu0 0
      %1125 = vmatpush.bf16.msra.mxu0 0
      %1126 = vmatpush.bf16.msra.mxu0 0
      %1127 = vmatpush.bf16.msra.mxu0 %v1118
      %1128 = vmatmul.bf16.gmra.mxu0 %v1115
      %v1129 = vpop.f32.mrf.mxu0
      %v1130 = vadd.f32 0.0, %v1129
      %v1131 = vpop.f32.mrf.mxu0
      %1132 = vdwg.mxu0
      %1133 = vrot.lane.b32.xlu0 %v825, 48
      %v1134 = vpop.permute.xlu0 %1133
      %v1136 = vsel %vm803, %v1111, 0
      %v1139 = vsel %vm884, %v1134, 0
      %1141 = vmatpush.bf16.msra.mxu0 0
      %1142 = vmatpush.bf16.msra.mxu0 0
      %1143 = vmatpush.bf16.msra.mxu0 0
      %1144 = vmatpush.bf16.msra.mxu0 0
      %1145 = vmatpush.bf16.msra.mxu0 0
      %1146 = vmatpush.bf16.msra.mxu0 0
      %1147 = vmatpush.bf16.msra.mxu0 0
      %1148 = vmatpush.bf16.msra.mxu0 %v1139
      %1149 = vmatmul.bf16.gmra.mxu0 %v1136
      %v1150 = vpop.f32.mrf.mxu0
      %v1151 = vadd.f32 0.0, %v1150
      %v1152 = vpop.f32.mrf.mxu0
      %1153 = vdwg.mxu0
      %1154 = vrot.lane.b32.xlu0 %v800, 104
      %v1155 = vpop.permute.xlu0 %1154
      %1156 = vrot.lane.b32.xlu0 %v800, 72
      %v1157 = vpop.permute.xlu0 %1156
      %v1159 = vsel %vm803, %v1155, 0
      %v1162 = vsel %vm803, %v1157, 0
      %1164 = vmatpush.bf16.xpose.msra.mxu0 0
      %1165 = vmatpush.bf16.xpose.msra.mxu0 0
      %1166 = vmatpush.bf16.xpose.msra.mxu0 0
      %1167 = vmatpush.bf16.xpose.msra.mxu0 0
      %1168 = vmatpush.bf16.xpose.msra.mxu0 0
      %1169 = vmatpush.bf16.xpose.msra.mxu0 0
      %1170 = vmatpush.bf16.xpose.msra.mxu0 0
      %1171 = vmatpush.bf16.xpose.msra.mxu0 %v1162
      %1172 = vmatmul.bf16.gmra.mxu0 %v1159
      %v1173 = vpop.f32.mrf.mxu0
      %v1174 = vadd.f32 0.0, %v1173
      %v1175 = vpop.f32.mrf.mxu0
      %1176 = vdwg.mxu0
      %1177 = vrot.lane.b32.xlu0 %v825, 104
      %v1178 = vpop.permute.xlu0 %1177
      %1179 = vrot.lane.b32.xlu0 %v825, 72
      %v1180 = vpop.permute.xlu0 %1179
      %v1182 = vsel %vm803, %v1178, 0
      %v1185 = vsel %vm803, %v1180, 0
      %1187 = vmatpush.bf16.xpose.msra.mxu0 0
      %1188 = vmatpush.bf16.xpose.msra.mxu0 0
      %1189 = vmatpush.bf16.xpose.msra.mxu0 0
      %1190 = vmatpush.bf16.xpose.msra.mxu0 0
      %1191 = vmatpush.bf16.xpose.msra.mxu0 0
      %1192 = vmatpush.bf16.xpose.msra.mxu0 0
      %1193 = vmatpush.bf16.xpose.msra.mxu0 0
      %1194 = vmatpush.bf16.xpose.msra.mxu0 %v1185
      %1195 = vmatmul.bf16.gmra.mxu0 %v1182
      %v1196 = vpop.f32.mrf.mxu0
      %v1197 = vadd.f32 0.0, %v1196
      %v1198 = vpop.f32.mrf.mxu0
      %1199 = vdwg.mxu0
      %v1200 = vmul.f32 %v1174, 0.35355338
      %v1201 = vmul.f32 %v1197, 0.35355338
      %v1202 = vadd.f32 %v1200, %v849
      %v1203 = vadd.f32 %v1201, %v850
      %v1204 = vsel %vm803, %v1202, -inf
      %1205 = vmax.xlane.f32.xlu0 %v1204
      %v1206 = vpop.xlane.xlu0 %1205
      %v1207 = vsel %vm803, %v1203, -inf
      %1208 = vmax.xlane.f32.xlu0 %v1207
      %v1209 = vpop.xlane.xlu0 %1208
      %v1210 = vsub.f32 %v1202, %v1206
      %v1211 = vsub.f32 %v1203, %v1209
      %v1212 = vmul.f32 %v1210, 1.442695
      %v1213 = vpow.pop %v1212
      %v1214 = vmul.f32 %v1211, 1.442695
      %v1215 = vpow.pop %v1214
      %v1216 = vsel %vm803, %v1213, 0.0
      %1217 = vadd.xlane.f32.xlu0 %v1216
      %v1218 = vpop.xlane.xlu0 %1217
      %v1219 = vsel %vm803, %v1215, 0.0
      %1220 = vadd.xlane.f32.xlu0 %v1219
      %v1221 = vpop.xlane.xlu0 %1220
      %v1222 = vrcp.pop %v1218
      %v1223 = vrcp.pop %v1221
      %v1224 = vmul.f32 %v1213, %v1222
      %v1225 = vmul.f32 %v1215, %v1223
      %v1226 = vpack.c.bf16 %v1224, %v1224
      %v1227 = vpack.c.bf16 %v1225, %v1225
      %1228 = vrot.lane.b32.xlu0 %v800, 40
      %v1229 = vpop.permute.xlu0 %1228
      %v1231 = vsel %vm803, %v1226, 0
      %v1234 = vsel %vm884, %v1229, 0
      %1236 = vmatpush.bf16.msra.mxu0 0
      %1237 = vmatpush.bf16.msra.mxu0 0
      %1238 = vmatpush.bf16.msra.mxu0 0
      %1239 = vmatpush.bf16.msra.mxu0 0
      %1240 = vmatpush.bf16.msra.mxu0 0
      %1241 = vmatpush.bf16.msra.mxu0 0
      %1242 = vmatpush.bf16.msra.mxu0 0
      %1243 = vmatpush.bf16.msra.mxu0 %v1234
      %1244 = vmatmul.bf16.gmra.mxu0 %v1231
      %v1245 = vpop.f32.mrf.mxu0
      %v1246 = vadd.f32 0.0, %v1245
      %v1247 = vpop.f32.mrf.mxu0
      %1248 = vdwg.mxu0
      %1249 = vrot.lane.b32.xlu0 %v825, 40
      %v1250 = vpop.permute.xlu0 %1249
      %v1252 = vsel %vm803, %v1227, 0
      %v1255 = vsel %vm884, %v1250, 0
      %1257 = vmatpush.bf16.msra.mxu0 0
      %1258 = vmatpush.bf16.msra.mxu0 0
      %1259 = vmatpush.bf16.msra.mxu0 0
      %1260 = vmatpush.bf16.msra.mxu0 0
      %1261 = vmatpush.bf16.msra.mxu0 0
      %1262 = vmatpush.bf16.msra.mxu0 0
      %1263 = vmatpush.bf16.msra.mxu0 0
      %1264 = vmatpush.bf16.msra.mxu0 %v1255
      %1265 = vmatmul.bf16.gmra.mxu0 %v1252
      %v1266 = vpop.f32.mrf.mxu0
      %v1267 = vadd.f32 0.0, %v1266
      %v1268 = vpop.f32.mrf.mxu0
      %1269 = vdwg.mxu0
      %1272 = vrot.lane.b32.xlu0 %v1014, 8
      %v1273 = vpop.permute.xlu0 %1272
      %1274 = vrot.lane.b32.xlu0 %v1035, 8
      %v1275 = vpop.permute.xlu0 %1274
      %1280 = vrot.lane.b32.xlu0 %v1130, 16
      %v1281 = vpop.permute.xlu0 %1280
      %1282 = vrot.lane.b32.xlu0 %v1151, 16
      %v1283 = vpop.permute.xlu0 %1282
      %1288 = vrot.lane.b32.xlu0 %v1246, 24
      %v1289 = vpop.permute.xlu0 %1288
      %1290 = vrot.lane.b32.xlu0 %v1267, 24
      %v1291 = vpop.permute.xlu0 %1290
      %v1294 = vsel %vm803, %v898, %v1273
      %v1295 = vsel %vm803, %v919, %v1275
      %vm1296 = vcmask 130048
      %v1297 = vsel %vm1296, %v1294, %v1281
      %v1298 = vsel %vm1296, %v1295, %v1283
      %vm1299 = vcmask 195584
      %v1300 = vsel %vm1299, %v1297, %v1289
      %v1301 = vsel %vm1299, %v1298, %v1291
      %v1302 = vpack.c.bf16 %v1301, %v1300
      %v1303 = vld [vmem:[%s647] sm:$0xf]
      %v1304 = vld [vmem:[%s647 + $0x4] sm:$0xf]
      %v1305 = vld [vmem:[%s647 + $0x8] sm:$0xf]
      %v1306 = vld [vmem:[%s647 + $0xc] sm:$0xf]
      %v1307 = vld [vmem:[%s650] sm:$0x1]
      %v1309 = vperm.slane %v1307, 0
      %v1315 = vunpack.c.l.b16 %v1303
      %v1316 = vunpack.c.l.b16 %v1304
      %v1317 = vunpack.c.l.b16 %v1305
      %v1318 = vunpack.c.l.b16 %v1306
      %v1319 = vpack.c.b16 %v1316, %v1315
      %v1320 = vpack.c.b16 %v1318, %v1317
      %v1324 = vsel %vm775, %v1302, 0
      %1326 = vmatpush.bf16.msra.mxu0 0
      %1327 = vmatpush.bf16.msra.mxu0 0
      %1328 = vmatpush.bf16.msra.mxu0 0
      %1329 = vmatpush.bf16.msra.mxu0 0
      %1330 = vmatpush.bf16.msra.mxu0 0
      %1331 = vmatpush.bf16.msra.mxu0 0
      %1332 = vmatpush.bf16.msra.mxu0 %v1320
      %1333 = vmatpush.bf16.msra.mxu0 %v1319
      %1334 = vmatmul.bf16.gmra.mxu0 %v1324
      %v1335 = vpop.f32.mrf.mxu0
      %v1336 = vadd.f32 %v1309, %v1335
      %v1337 = vpop.f32.mrf.mxu0
      %v1338 = vadd.f32 %v1309, %v1337
      %1339 = vdwg.mxu0
      %v1340 = vadd.f32 %v1336, %v752
      %v1341 = vadd.f32 %v1338, %v753
      %v1342 = vld [vmem:[%s653] sm:$0x1]
      %v1343 = vld [vmem:[%s656] sm:$0x1]
      %v1344 = vsel %vm775, %v1340, 0.0
      %1345 = vadd.xlane.f32.xlu0 %v1344
      %v1346 = vpop.xlane.xlu0 %1345
      %v1347 = vsel %vm775, %v1341, 0.0
      %1348 = vadd.xlane.f32.xlu0 %v1347
      %v1349 = vpop.xlane.xlu0 %1348
      %v1350 = vrcp.pop 32.0
      %v1351 = vmul.f32 32.0, %v1350
      %v1352 = vsub.f32 1.0, %v1351
      %v1353 = vmul.f32 %v1350, %v1352
      %v1354 = vadd.f32 %v1350, %v1353
      %vm1355 = vweird.f32 %v1350
      %v1356 = vsel %vm1355, %v1350, %v1354
      %v1357 = vmul.f32 %v1346, %v1356
      %v1358 = vmul.f32 %v1349, %v1356
      %v1359 = vsub.f32 %v1340, %v1357
      %v1360 = vsub.f32 %v1341, %v1358
      %v1361 = vmul.f32 %v1359, %v1359
      %v1362 = vmul.f32 %v1360, %v1360
      %v1363 = vsel %vm775, %v1361, 0.0
      %1364 = vadd.xlane.f32.xlu0 %v1363
      %v1365 = vpop.xlane.xlu0 %1364
      %v1366 = vsel %vm775, %v1362, 0.0
      %1367 = vadd.xlane.f32.xlu0 %v1366
      %v1368 = vpop.xlane.xlu0 %1367
      %v1369 = vmul.f32 %v1365, %v1356
      %v1370 = vmul.f32 %v1368, %v1356
      %v1371 = vadd.f32 %v1369, 1e-12
      %v1372 = vadd.f32 %v1370, 1e-12
      %v1373 = vrsqrt.pop %v1371
      %v1374 = vmul.f32 %v1373, %v1371
      %v1375 = vmul.f32 %v1374, %v1373
      %v1376 = vmul.f32 0.5, %v1375
      %v1377 = vsub.f32 1.5, %v1376
      %v1378 = vmul.f32 %v1373, %v1377
      %vm1379 = vweird.f32 %v1371
      %vm1380 = vweird.f32 %v1373
      %vm1381 = vmor %vm1379, %vm1380
      %v1382 = vsel %vm1381, %v1373, %v1378
      %v1383 = vrsqrt.pop %v1372
      %v1384 = vmul.f32 %v1383, %v1372
      %v1385 = vmul.f32 %v1384, %v1383
      %v1386 = vmul.f32 0.5, %v1385
      %v1387 = vsub.f32 1.5, %v1386
      %v1388 = vmul.f32 %v1383, %v1387
      %vm1389 = vweird.f32 %v1372
      %vm1390 = vweird.f32 %v1383
      %vm1391 = vmor %vm1389, %vm1390
      %v1392 = vsel %vm1391, %v1383, %v1388
      %v1393 = vmul.f32 %v1359, %v1382
      %v1394 = vmul.f32 %v1360, %v1392
      %v1396 = vperm.slane %v1342, 0
      %v1398 = vmul.f32 %v1393, %v1396
      %v1399 = vmul.f32 %v1394, %v1396
      %v1401 = vperm.slane %v1343, 0
      %v1403 = vadd.f32 %v1398, %v1401
      %v1404 = vadd.f32 %v1399, %v1401
      %v1405 = vpack.c.bf16 %v1404, %v1403
      %v1406 = vld [vmem:[%s661] sm:$0xf]
      %v1407 = vld [vmem:[%s661 + $0x4] sm:$0xf]
      %v1408 = vld [vmem:[%s661 + $0x8] sm:$0xf]
      %v1409 = vld [vmem:[%s661 + $0xc] sm:$0xf]
      %v1410 = vld [vmem:[%s664] sm:$0x1]
      %v1412 = vperm.slane %v1410, 0
      %v1418 = vunpack.c.l.b16 %v1406
      %v1419 = vunpack.c.l.b16 %v1407
      %v1420 = vunpack.c.l.b16 %v1408
      %v1421 = vunpack.c.l.b16 %v1409
      %v1422 = vpack.c.b16 %v1419, %v1418
      %v1423 = vpack.c.b16 %v1421, %v1420
      %v1427 = vsel %vm775, %v1405, 0
      %1429 = vmatpush.bf16.msra.mxu0 0
      %1430 = vmatpush.bf16.msra.mxu0 0
      %1431 = vmatpush.bf16.msra.mxu0 0
      %1432 = vmatpush.bf16.msra.mxu0 0
      %1433 = vmatpush.bf16.msra.mxu0 0
      %1434 = vmatpush.bf16.msra.mxu0 0
      %1435 = vmatpush.bf16.msra.mxu0 %v1423
      %1436 = vmatpush.bf16.msra.mxu0 %v1422
      %1437 = vmatmul.bf16.gmra.mxu0 %v1427
      %v1438 = vpop.f32.mrf.mxu0
      %v1439 = vadd.f32 %v1412, %v1438
      %v1440 = vpop.f32.mrf.mxu0
      %v1441 = vadd.f32 %v1412, %v1440
      %1442 = vdwg.mxu0
      %v1443 = vmul.f32 %v1439, 0.5
      %v1444 = vmul.f32 %v1441, 0.5
      %v1445 = vmul.f32 %v1439, 0.044715
      %v1446 = vmul.f32 %v1441, 0.044715
      %v1447 = vmul.f32 %v1445, %v1439
      %v1448 = vmul.f32 %v1446, %v1441
      %v1449 = vmul.f32 %v1447, %v1439
      %v1450 = vmul.f32 %v1448, %v1441
      %v1451 = vadd.f32 %v1439, %v1449
      %v1452 = vadd.f32 %v1441, %v1450
      %v1453 = vmul.f32 %v1451, 0.7978846
      %v1454 = vmul.f32 %v1452, 0.7978846
      %v1455 = vtanh.pop %v1453
      %v1456 = vtanh.pop %v1454
      %v1457 = vadd.f32 %v1455, 1.0
      %v1458 = vadd.f32 %v1456, 1.0
      %v1459 = vmul.f32 %v1443, %v1457
      %v1460 = vmul.f32 %v1444, %v1458
      %v1461 = vpack.c.bf16 %v1460, %v1459
      %v1462 = vld [vmem:[%s669] sm:$0xf]
      %v1463 = vld [vmem:[%s669 + $0x4] sm:$0xf]
      %v1464 = vld [vmem:[%s669 + $0x8] sm:$0xf]
      %v1465 = vld [vmem:[%s669 + $0xc] sm:$0xf]
      %v1466 = vld [vmem:[%s669 + $0x10] sm:$0xf]
      %v1467 = vld [vmem:[%s669 + $0x14] sm:$0xf]
      %v1468 = vld [vmem:[%s669 + $0x18] sm:$0xf]
      %v1469 = vld [vmem:[%s669 + $0x1c] sm:$0xf]
      %v1470 = vld [vmem:[%s672] sm:$0x1]
      %v1472 = vperm.slane %v1470, 0
      %v1482 = vunpack.c.l.b16 %v1462
      %v1483 = vunpack.c.l.b16 %v1463
      %v1484 = vunpack.c.l.b16 %v1464
      %v1485 = vunpack.c.l.b16 %v1465
      %v1486 = vunpack.c.l.b16 %v1466
      %v1487 = vunpack.c.l.b16 %v1467
      %v1488 = vunpack.c.l.b16 %v1468
      %v1489 = vunpack.c.l.b16 %v1469
      %v1490 = vpack.c.b16 %v1483, %v1482
      %v1491 = vpack.c.b16 %v1485, %v1484
      %v1492 = vpack.c.b16 %v1487, %v1486
      %v1493 = vpack.c.b16 %v1489, %v1488
      %vm1498 = vcmask 523264
      %v1500 = vsel %vm1498, %v1461, 0
      %1502 = vmatpush.bf16.msra.mxu0 0
      %1503 = vmatpush.bf16.msra.mxu0 0
      %1504 = vmatpush.bf16.msra.mxu0 0
      %1505 = vmatpush.bf16.msra.mxu0 0
      %1506 = vmatpush.bf16.msra.mxu0 %v1493
      %1507 = vmatpush.bf16.msra.mxu0 %v1492
      %1508 = vmatpush.bf16.msra.mxu0 %v1491
      %1509 = vmatpush.bf16.msra.mxu0 %v1490
      %1510 = vmatmul.bf16.gmra.mxu0 %v1500
      %v1511 = vpop.f32.mrf.mxu0
      %v1512 = vadd.f32 %v1472, %v1511
      %v1513 = vpop.f32.mrf.mxu0
      %v1514 = vadd.f32 %v1472, %v1513
      %1515 = vdwg.mxu0
      %v1516 = vadd.f32 %v1512, %v1403
      %v1517 = vadd.f32 %v1514, %v1404
      %v1518 = vld [vmem:[%s675] sm:$0x1]
      %v1519 = vld [vmem:[%s678] sm:$0x1]
      %v1520 = vsel %vm775, %v1516, 0.0
      %1521 = vadd.xlane.f32.xlu0 %v1520
      %v1522 = vpop.xlane.xlu0 %1521
      %v1523 = vsel %vm775, %v1517, 0.0
      %1524 = vadd.xlane.f32.xlu0 %v1523
      %v1525 = vpop.xlane.xlu0 %1524
      %v1526 = vmul.f32 %v1522, %v1356
      %v1527 = vmul.f32 %v1525, %v1356
      %v1528 = vsub.f32 %v1516, %v1526
      %v1529 = vsub.f32 %v1517, %v1527
      %v1530 = vmul.f32 %v1528, %v1528
      %v1531 = vmul.f32 %v1529, %v1529
      %v1532 = vsel %vm775, %v1530, 0.0
      %1533 = vadd.xlane.f32.xlu0 %v1532
      %v1534 = vpop.xlane.xlu0 %1533
      %v1535 = vsel %vm775, %v1531, 0.0
      %1536 = vadd.xlane.f32.xlu0 %v1535
      %v1537 = vpop.xlane.xlu0 %1536
      %v1538 = vmul.f32 %v1534, %v1356
      %v1539 = vmul.f32 %v1537, %v1356
      %v1540 = vadd.f32 %v1538, 1e-12
      %v1541 = vadd.f32 %v1539, 1e-12
      %v1542 = vrsqrt.pop %v1540
      %v1543 = vmul.f32 %v1542, %v1540
      %v1544 = vmul.f32 %v1543, %v1542
      %v1545 = vmul.f32 0.5, %v1544
      %v1546 = vsub.f32 1.5, %v1545
      %v1547 = vmul.f32 %v1542, %v1546
      %vm1548 = vweird.f32 %v1540
      %vm1549 = vweird.f32 %v1542
      %vm1550 = vmor %vm1548, %vm1549
      %v1551 = vsel %vm1550, %v1542, %v1547
      %v1552 = vrsqrt.pop %v1541
      %v1553 = vmul.f32 %v1552, %v1541
      %v1554 = vmul.f32 %v1553, %v1552
      %v1555 = vmul.f32 0.5, %v1554
      %v1556 = vsub.f32 1.5, %v1555
      %v1557 = vmul.f32 %v1552, %v1556
      %vm1558 = vweird.f32 %v1541
      %vm1559 = vweird.f32 %v1552
      %vm1560 = vmor %vm1558, %vm1559
      %v1561 = vsel %vm1560, %v1552, %v1557
      %v1562 = vmul.f32 %v1528, %v1551
      %v1563 = vmul.f32 %v1529, %v1561
      %v1565 = vperm.slane %v1518, 0
      %v1567 = vmul.f32 %v1562, %v1565
      %v1568 = vmul.f32 %v1563, %v1565
      %v1570 = vperm.slane %v1519, 0
      %v1572 = vadd.f32 %v1567, %v1570
      %v1573 = vadd.f32 %v1568, %v1570
      %1574 = vst.msk [vmem:[#allocation2] sm:$0xff] %vm775, %v1572
      %1575 = vst.msk [vmem:[#allocation2 + $0x8] sm:$0xff] %vm775, %v1573
      %p1576 = scmp.eq.s32.totalorder %s27, 1
      // Predicated region
      $region89: #{bert_classifier_forward.1} parent=83 // pred_check
        %p1577 = pneg %p1576
      $region90: #{bert_classifier_forward.1} parent=83 // pred_check_branch
        %1579 = sbr.rel (%p1577) target = $region92
      $region91: #{bert_classifier_forward.1} parent=83 // pred_region
        %1580 = vst.msk [vmem:[%s16] sm:$0xff] %vm775, %v1572
        %1581 = vst.msk [vmem:[%s16 + $0x8] sm:$0xff] %vm775, %v1573
      $region92: #{bert_classifier_forward.1} parent=83 // pred_fallthru
        _
      // Predicated region
      $region93: #{bert_classifier_forward.1} parent=83 // pred_check
        %p1582 = pneg %p436
      $region94: #{bert_classifier_forward.1} parent=83 // pred_check_branch
        %1584 = sbr.rel (%p1582) target = $region96
      $region95: #{bert_classifier_forward.1} parent=83 // pred_region
        _
      $region96: #{bert_classifier_forward.1} parent=83 // pred_fallthru
        _
      // Predicated region
      $region97: #{bert_classifier_forward.1} parent=83 // pred_check
        %p1585 = pneg %p436
      $region98: #{bert_classifier_forward.1} parent=83 // pred_check_branch
        %1587 = sbr.rel (%p1585) target = $region100
      $region99: #{bert_classifier_forward.1} parent=83 // pred_region
        _
      $region100: #{bert_classifier_forward.1} parent=83 // pred_fallthru
        _
    $region84: #{bert_classifier_forward.1} parent=5 // pred_fallthru
      _
    %p1588 = scmp.le.s32.totalorder 2, %s22
    // Predicated region
    $region101: #{bert_classifier_forward.1} parent=5 // pred_check
      %p1589 = pneg %p1588
    $region102: #{bert_classifier_forward.1} parent=5 // pred_check_branch
      %1591 = sbr.rel (%p1589) target = $region104
    $region103: #{bert_classifier_forward.1} parent=5 // pred_region
      %s1592 = ssub.s32 %s22, 2
    $region104: #{bert_classifier_forward.1} parent=5 // pred_fallthru
      _
  $region6: #{bert_classifier_forward.1} parent=0 // loop_footer
    %s26 = sadd.s32 1, %s22
  $region7: #{bert_classifier_forward.1} parent=0 // loop_footer_branch
    %21 = sbr.rel target = $region3
  $region8: #{bert_classifier_forward.1} parent=0 // loop_exit
    _

</llo_original>
